<compile_context>
chip_gen: v7x
topology: tpu7x:2x2x1
jax: 0.10.0
libtpu: 0.0.40
codegen_flags: <defaults>
</compile_context>

<pallas_src>
import functools
import math

import jax
import jax.numpy as jnp
from jax import lax
from jax.experimental import pallas as pl
from jax.experimental.pallas import tpu as pltpu


# ----------------------------- Pallas kernel -------------------------------

def gru_kernel(gi_r_ref, gi_z_ref, gi_n_ref,
               whr_ref, whz_ref, whn_ref,
               bhn_ref, h0_ref, out_ref):
    """Single-layer GRU recurrence over the full sequence.

    gi_r_ref/gi_z_ref/gi_n_ref : (S, B, H) precomputed input-gate preactivations
                                 (gi_r/gi_z already include b_ih + b_hh; gi_n
                                  includes b_ih only).
    whr_ref/whz_ref/whn_ref    : (H, H) hidden->hidden weights (already transposed
                                 so gh = h @ W).
    bhn_ref : (B, H) hidden bias of the n gate, pre-broadcast.
    h0_ref  : (B, H) initial hidden state.
    out_ref : (S, B, H) all hidden states (time-major).
    """
    seq_len = gi_r_ref.shape[0]

    # Hoisted out of the recurrence: weights & bias live in vregs across steps.
    w_r = whr_ref[...]
    w_z = whz_ref[...]
    w_n = whn_ref[...]
    b_n = bhn_ref[...]

    def step(t, h_prev):
        # Only the hidden->hidden matmuls remain on the serial t -> t+1 chain.
        gh_r = jnp.dot(h_prev, w_r, preferred_element_type=jnp.float32)
        gh_z = jnp.dot(h_prev, w_z, preferred_element_type=jnp.float32)
        gh_n = jnp.dot(h_prev, w_n, preferred_element_type=jnp.float32) + b_n

        r = jax.nn.sigmoid(gi_r_ref[t] + gh_r)
        z = jax.nn.sigmoid(gi_z_ref[t] + gh_z)
        n = jnp.tanh(gi_n_ref[t] + r * gh_n)
        h_new = n + z * (h_prev - n)          # == (1 - z) * n + z * h_prev

        out_ref[t] = h_new
        return h_new

    # Short, static trip-count: fully unroll so the scheduler can overlap the
    # EUP sigmoid/tanh and output stores of step t with the matmuls of step t+1.
    lax.fori_loop(0, seq_len, step, h0_ref[...], unroll=True)


# ------------------------------ wrapper -------------------------------------

@jax.jit
def rnn_forward(x, params, h=None):
    """Equivalent of RNN.forward(x, h) with flavour='gru', num_layers=1, final_ff=Identity.

    x : (batch, seq, input_size) float32
    h : optional (num_layers=1, batch, hidden) float32
    returns out: (batch, seq, hidden)
    """
    B, S, I = x.shape
    w_ih = params["w_ih"].astype(jnp.float32)   # (3H, I)  PyTorch weight_ih_l0 (rows: r, z, n)
    w_hh = params["w_hh"].astype(jnp.float32)   # (3H, H)  PyTorch weight_hh_l0
    b_ih = params["b_ih"].astype(jnp.float32)   # (3H,)
    b_hh = params["b_hh"].astype(jnp.float32)   # (3H,)
    H = w_hh.shape[1]

    # Gate-major views (g in {r, z, n}).
    wih_g = w_ih.reshape(3, H, I)               # (3, H, I)
    whh_g = w_hh.reshape(3, H, H)               # (3, H, H)
    bih_g = b_ih.reshape(3, H)
    bhh_g = b_hh.reshape(3, H)

    # ---- Hoisted input projection for the whole sequence (one batched matmul,
    # ---- off the serial recurrence path). Output is time-major, gates separate.
    x32 = x.astype(jnp.float32)
    gi = jnp.einsum('bsi,ghi->gsbh', x32, wih_g)        # (3, S, B, H)
    gi_r = gi[0] + (bih_g[0] + bhh_g[0])                # fold b_hh_r (exact)
    gi_z = gi[1] + (bih_g[1] + bhh_g[1])                # fold b_hh_z (exact)
    gi_n = gi[2] + bih_g[2]                             # b_hh_n must stay inside r*(...)

    # Hidden->hidden weights, transposed so the kernel does h @ W.
    whr_t = jnp.transpose(whh_g[0])                     # (H, H)
    whz_t = jnp.transpose(whh_g[1])
    whn_t = jnp.transpose(whh_g[2])
    bhn = jnp.broadcast_to(bhh_g[2], (B, H))            # pre-broadcast, hoisted

    if h is None:
        h0 = jnp.zeros((B, H), jnp.float32)
    else:
        h0 = h[0].astype(jnp.float32)

    vmem = pl.BlockSpec(memory_space=pltpu.MemorySpace.VMEM)
    out_tm = pl.pallas_call(
        gru_kernel,
        out_shape=jax.ShapeDtypeStruct((S, B, H), jnp.float32),
        in_specs=[vmem] * 8,
        out_specs=vmem,
        compiler_params=pltpu.CompilerParams(vmem_limit_bytes=32 * 1024 * 1024),
    )(gi_r, gi_z, gi_n, whr_t, whz_t, whn_t, bhn, h0)

    out = jnp.transpose(out_tm, (1, 0, 2))              # (B, S, H)
    # final_ff = nn.Identity()  -> no-op
    return out


# ------------------------- pure-JAX reference (for check) -------------------

def rnn_reference(x, params, h=None):
    w_ih, w_hh = params["w_ih"], params["w_hh"]
    b_ih, b_hh = params["b_ih"], params["b_hh"]
    B = x.shape[0]
    H = w_hh.shape[1]
    h0 = jnp.zeros((B, H), jnp.float32) if h is None else h[0]

    def step(h_prev, x_t):
        gi = x_t @ w_ih.T + b_ih
        gh = h_prev @ w_hh.T + b_hh
        i_r, i_z, i_n = jnp.split(gi, 3, axis=-1)
        h_r, h_z, h_n = jnp.split(gh, 3, axis=-1)
        r = jax.nn.sigmoid(i_r + h_r)
        z = jax.nn.sigmoid(i_z + h_z)
        n = jnp.tanh(i_n + r * h_n)
        h_new = (1.0 - z) * n + z * h_prev
        return h_new, h_new

    _, outs = lax.scan(step, h0, jnp.transpose(x, (1, 0, 2)))
    return jnp.transpose(outs, (1, 0, 2))


# ------------------------------- main ---------------------------------------

if __name__ == "__main__":
    # module defaults: input_size=3, hidden_size=32, num_layers=1, flavour='gru'
    INPUT_SIZE, HIDDEN, NUM_LAYERS = 3, 32, 1
    BATCH, SEQ = 2, 8

    key = jax.random.PRNGKey(0)
    k_x, k_h, k1, k2, k3, k4 = jax.random.split(key, 6)

    # deterministic parameter init, matching PyTorch GRU shapes and U(-1/sqrt(H), 1/sqrt(H))
    std = 1.0 / math.sqrt(HIDDEN)
    params = {
        "w_ih": jax.random.uniform(k1, (3 * HIDDEN, INPUT_SIZE), jnp.float32, -std, std),
        "w_hh": jax.random.uniform(k2, (3 * HIDDEN, HIDDEN), jnp.float32, -std, std),
        "b_ih": jax.random.uniform(k3, (3 * HIDDEN,), jnp.float32, -std, std),
        "b_hh": jax.random.uniform(k4, (3 * HIDDEN,), jnp.float32, -std, std),
    }

    x = jax.random.normal(k_x, (BATCH, SEQ, INPUT_SIZE), jnp.float32)
    h0 = jax.random.normal(k_h, (NUM_LAYERS, BATCH, HIDDEN), jnp.float32)

    # forward with default h=None
    out = rnn_forward(x, params)
    out = jax.block_until_ready(out)
    assert out.shape == (BATCH, SEQ, HIDDEN)

    # forward with explicit initial hidden state
    out_h = rnn_forward(x, params, h0)
    out_h = jax.block_until_ready(out_h)

    # correctness check against pure-JAX reference
    ref = rnn_reference(x, params)
    ref_h = rnn_reference(x, params, h0)
    assert jnp.allclose(out, ref, rtol=1e-4, atol=1e-4), "mismatch (h=None)"
    assert jnp.allclose(out_h, ref_h, rtol=1e-4, atol=1e-4), "mismatch (h given)"

    print("KERNEL_OK")
</pallas_src>

<mosaic_0001>
module attributes {stable_mosaic.version = 11 : i64} {
  func.func @gru_kernel(%arg0: memref<8x2x32xf32, #tpu.memory_space<vmem>>, %arg1: memref<8x2x32xf32, #tpu.memory_space<vmem>>, %arg2: memref<8x2x32xf32, #tpu.memory_space<vmem>>, %arg3: memref<32x32xf32, #tpu.memory_space<vmem>>, %arg4: memref<32x32xf32, #tpu.memory_space<vmem>>, %arg5: memref<32x32xf32, #tpu.memory_space<vmem>>, %arg6: memref<2x32xf32, #tpu.memory_space<vmem>>, %arg7: memref<2x32xf32, #tpu.memory_space<vmem>>, %arg8: memref<8x2x32xf32, #tpu.memory_space<vmem>>) attributes {dimension_semantics = [], scalar_prefetch = 0 : i64, scratch_operands = 0 : i64, tpu.core_type = #tpu.core_type<tc>} {
    %c0 = arith.constant 0 : index
    %c0_0 = arith.constant 0 : index
    %0 = vector.load %arg3[%c0, %c0_0] : memref<32x32xf32, #tpu.memory_space<vmem>>, vector<32x32xf32>
    %c0_1 = arith.constant 0 : index
    %c0_2 = arith.constant 0 : index
    %1 = vector.load %arg4[%c0_1, %c0_2] : memref<32x32xf32, #tpu.memory_space<vmem>>, vector<32x32xf32>
    %c0_3 = arith.constant 0 : index
    %c0_4 = arith.constant 0 : index
    %2 = vector.load %arg5[%c0_3, %c0_4] : memref<32x32xf32, #tpu.memory_space<vmem>>, vector<32x32xf32>
    %c0_5 = arith.constant 0 : index
    %c0_6 = arith.constant 0 : index
    %3 = vector.load %arg6[%c0_5, %c0_6] : memref<2x32xf32, #tpu.memory_space<vmem>>, vector<2x32xf32>
    %c0_7 = arith.constant 0 : index
    %c0_8 = arith.constant 0 : index
    %4 = vector.load %arg7[%c0_7, %c0_8] : memref<2x32xf32, #tpu.memory_space<vmem>>, vector<2x32xf32>
    %c0_i32 = arith.constant 0 : i32
    %cst = arith.constant dense<0.000000e+00> : vector<2x32xf32>
    %5 = tpu.matmul %4, %0, %cst {dimension_numbers = #tpu.dot_dimension_numbers<[1], [0], [0], [1], [0, 0, 1, 1], [], []>} : vector<2x32xf32>, vector<32x32xf32>, vector<2x32xf32> -> vector<2x32xf32>
    %cst_9 = arith.constant dense<0.000000e+00> : vector<2x32xf32>
    %6 = tpu.matmul %4, %1, %cst_9 {dimension_numbers = #tpu.dot_dimension_numbers<[1], [0], [0], [1], [0, 0, 1, 1], [], []>} : vector<2x32xf32>, vector<32x32xf32>, vector<2x32xf32> -> vector<2x32xf32>
    %cst_10 = arith.constant dense<0.000000e+00> : vector<2x32xf32>
    %7 = tpu.matmul %4, %2, %cst_10 {dimension_numbers = #tpu.dot_dimension_numbers<[1], [0], [0], [1], [0, 0, 1, 1], [], []>} : vector<2x32xf32>, vector<32x32xf32>, vector<2x32xf32> -> vector<2x32xf32>
    %8 = arith.addf %7, %3 : vector<2x32xf32>
    %9 = arith.index_cast %c0_i32 : i32 to index
    %c0_11 = arith.constant 0 : index
    %c0_12 = arith.constant 0 : index
    %10 = vector.load %arg0[%9, %c0_11, %c0_12] : memref<8x2x32xf32, #tpu.memory_space<vmem>>, vector<1x2x32xf32>
    %11 = vector.shape_cast %10 : vector<1x2x32xf32> to vector<2x32xf32>
    %12 = arith.addf %11, %5 : vector<2x32xf32>
    %13 = arith.negf %12 : vector<2x32xf32>
    %14 = math.exp %13 : vector<2x32xf32>
    %cst_13 = arith.constant 1.000000e+00 : f32
    %15 = vector.broadcast %cst_13 : f32 to vector<2x32xf32>
    %16 = arith.addf %15, %14 : vector<2x32xf32>
    %17 = arith.divf %15, %16 : vector<2x32xf32>
    %18 = arith.index_cast %c0_i32 : i32 to index
    %c0_14 = arith.constant 0 : index
    %c0_15 = arith.constant 0 : index
    %19 = vector.load %arg1[%18, %c0_14, %c0_15] : memref<8x2x32xf32, #tpu.memory_space<vmem>>, vector<1x2x32xf32>
    %20 = vector.shape_cast %19 : vector<1x2x32xf32> to vector<2x32xf32>
    %21 = arith.addf %20, %6 : vector<2x32xf32>
    %22 = arith.negf %21 : vector<2x32xf32>
    %23 = math.exp %22 : vector<2x32xf32>
    %cst_16 = arith.constant 1.000000e+00 : f32
    %24 = vector.broadcast %cst_16 : f32 to vector<2x32xf32>
    %25 = arith.addf %24, %23 : vector<2x32xf32>
    %26 = arith.divf %24, %25 : vector<2x32xf32>
    %27 = arith.index_cast %c0_i32 : i32 to index
    %c0_17 = arith.constant 0 : index
    %c0_18 = arith.constant 0 : index
    %28 = vector.load %arg2[%27, %c0_17, %c0_18] : memref<8x2x32xf32, #tpu.memory_space<vmem>>, vector<1x2x32xf32>
    %29 = vector.shape_cast %28 : vector<1x2x32xf32> to vector<2x32xf32>
    %30 = arith.mulf %17, %8 : vector<2x32xf32>
    %31 = arith.addf %29, %30 : vector<2x32xf32>
    %32 = math.tanh %31 : vector<2x32xf32>
    %33 = arith.subf %4, %32 : vector<2x32xf32>
    %34 = arith.mulf %26, %33 : vector<2x32xf32>
    %35 = arith.addf %32, %34 : vector<2x32xf32>
    %36 = arith.index_cast %c0_i32 : i32 to index
    %c0_19 = arith.constant 0 : index
    %c0_20 = arith.constant 0 : index
    %37 = vector.load %arg8[%36, %c0_19, %c0_20] : memref<8x2x32xf32, #tpu.memory_space<vmem>>, vector<1x2x32xf32>
    %38 = vector.shape_cast %37 : vector<1x2x32xf32> to vector<2x32xf32>
    %39 = vector.shape_cast %35 : vector<2x32xf32> to vector<1x2x32xf32>
    tpu.vector_store %arg8[%36, %c0_19, %c0_20], %39 {strides = array<i32>} : memref<8x2x32xf32, #tpu.memory_space<vmem>>, vector<1x2x32xf32>,
    %c1_i32 = arith.constant 1 : i32
    %cst_21 = arith.constant dense<0.000000e+00> : vector<2x32xf32>
    %40 = tpu.matmul %35, %0, %cst_21 {dimension_numbers = #tpu.dot_dimension_numbers<[1], [0], [0], [1], [0, 0, 1, 1], [], []>} : vector<2x32xf32>, vector<32x32xf32>, vector<2x32xf32> -> vector<2x32xf32>
    %cst_22 = arith.constant dense<0.000000e+00> : vector<2x32xf32>
    %41 = tpu.matmul %35, %1, %cst_22 {dimension_numbers = #tpu.dot_dimension_numbers<[1], [0], [0], [1], [0, 0, 1, 1], [], []>} : vector<2x32xf32>, vector<32x32xf32>, vector<2x32xf32> -> vector<2x32xf32>
    %cst_23 = arith.constant dense<0.000000e+00> : vector<2x32xf32>
    %42 = tpu.matmul %35, %2, %cst_23 {dimension_numbers = #tpu.dot_dimension_numbers<[1], [0], [0], [1], [0, 0, 1, 1], [], []>} : vector<2x32xf32>, vector<32x32xf32>, vector<2x32xf32> -> vector<2x32xf32>
    %43 = arith.addf %42, %3 : vector<2x32xf32>
    %44 = arith.index_cast %c1_i32 : i32 to index
    %c0_24 = arith.constant 0 : index
    %c0_25 = arith.constant 0 : index
    %45 = vector.load %arg0[%44, %c0_24, %c0_25] : memref<8x2x32xf32, #tpu.memory_space<vmem>>, vector<1x2x32xf32>
    %46 = vector.shape_cast %45 : vector<1x2x32xf32> to vector<2x32xf32>
    %47 = arith.addf %46, %40 : vector<2x32xf32>
    %48 = arith.negf %47 : vector<2x32xf32>
    %49 = math.exp %48 : vector<2x32xf32>
    %cst_26 = arith.constant 1.000000e+00 : f32
    %50 = vector.broadcast %cst_26 : f32 to vector<2x32xf32>
    %51 = arith.addf %50, %49 : vector<2x32xf32>
    %52 = arith.divf %50, %51 : vector<2x32xf32>
    %53 = arith.index_cast %c1_i32 : i32 to index
    %c0_27 = arith.constant 0 : index
    %c0_28 = arith.constant 0 : index
    %54 = vector.load %arg1[%53, %c0_27, %c0_28] : memref<8x2x32xf32, #tpu.memory_space<vmem>>, vector<1x2x32xf32>
    %55 = vector.shape_cast %54 : vector<1x2x32xf32> to vector<2x32xf32>
    %56 = arith.addf %55, %41 : vector<2x32xf32>
    %57 = arith.negf %56 : vector<2x32xf32>
    %58 = math.exp %57 : vector<2x32xf32>
    %cst_29 = arith.constant 1.000000e+00 : f32
    %59 = vector.broadcast %cst_29 : f32 to vector<2x32xf32>
    %60 = arith.addf %59, %58 : vector<2x32xf32>
    %61 = arith.divf %59, %60 : vector<2x32xf32>
    %62 = arith.index_cast %c1_i32 : i32 to index
    %c0_30 = arith.constant 0 : index
    %c0_31 = arith.constant 0 : index
    %63 = vector.load %arg2[%62, %c0_30, %c0_31] : memref<8x2x32xf32, #tpu.memory_space<vmem>>, vector<1x2x32xf32>
    %64 = vector.shape_cast %63 : vector<1x2x32xf32> to vector<2x32xf32>
    %65 = arith.mulf %52, %43 : vector<2x32xf32>
    %66 = arith.addf %64, %65 : vector<2x32xf32>
    %67 = math.tanh %66 : vector<2x32xf32>
    %68 = arith.subf %35, %67 : vector<2x32xf32>
    %69 = arith.mulf %61, %68 : vector<2x32xf32>
    %70 = arith.addf %67, %69 : vector<2x32xf32>
    %71 = arith.index_cast %c1_i32 : i32 to index
    %c0_32 = arith.constant 0 : index
    %c0_33 = arith.constant 0 : index
    %72 = vector.load %arg8[%71, %c0_32, %c0_33] : memref<8x2x32xf32, #tpu.memory_space<vmem>>, vector<1x2x32xf32>
    %73 = vector.shape_cast %72 : vector<1x2x32xf32> to vector<2x32xf32>
    %74 = vector.shape_cast %70 : vector<2x32xf32> to vector<1x2x32xf32>
    tpu.vector_store %arg8[%71, %c0_32, %c0_33], %74 {strides = array<i32>} : memref<8x2x32xf32, #tpu.memory_space<vmem>>, vector<1x2x32xf32>,
    %c2_i32 = arith.constant 2 : i32
    %cst_34 = arith.constant dense<0.000000e+00> : vector<2x32xf32>
    %75 = tpu.matmul %70, %0, %cst_34 {dimension_numbers = #tpu.dot_dimension_numbers<[1], [0], [0], [1], [0, 0, 1, 1], [], []>} : vector<2x32xf32>, vector<32x32xf32>, vector<2x32xf32> -> vector<2x32xf32>
    %cst_35 = arith.constant dense<0.000000e+00> : vector<2x32xf32>
    %76 = tpu.matmul %70, %1, %cst_35 {dimension_numbers = #tpu.dot_dimension_numbers<[1], [0], [0], [1], [0, 0, 1, 1], [], []>} : vector<2x32xf32>, vector<32x32xf32>, vector<2x32xf32> -> vector<2x32xf32>
    %cst_36 = arith.constant dense<0.000000e+00> : vector<2x32xf32>
    %77 = tpu.matmul %70, %2, %cst_36 {dimension_numbers = #tpu.dot_dimension_numbers<[1], [0], [0], [1], [0, 0, 1, 1], [], []>} : vector<2x32xf32>, vector<32x32xf32>, vector<2x32xf32> -> vector<2x32xf32>
    %78 = arith.addf %77, %3 : vector<2x32xf32>
    %79 = arith.index_cast %c2_i32 : i32 to index
    %c0_37 = arith.constant 0 : index
    %c0_38 = arith.constant 0 : index
    %80 = vector.load %arg0[%79, %c0_37, %c0_38] : memref<8x2x32xf32, #tpu.memory_space<vmem>>, vector<1x2x32xf32>
    %81 = vector.shape_cast %80 : vector<1x2x32xf32> to vector<2x32xf32>
    %82 = arith.addf %81, %75 : vector<2x32xf32>
    %83 = arith.negf %82 : vector<2x32xf32>
    %84 = math.exp %83 : vector<2x32xf32>
    %cst_39 = arith.constant 1.000000e+00 : f32
    %85 = vector.broadcast %cst_39 : f32 to vector<2x32xf32>
    %86 = arith.addf %85, %84 : vector<2x32xf32>
    %87 = arith.divf %85, %86 : vector<2x32xf32>
    %88 = arith.index_cast %c2_i32 : i32 to index
    %c0_40 = arith.constant 0 : index
    %c0_41 = arith.constant 0 : index
    %89 = vector.load %arg1[%88, %c0_40, %c0_41] : memref<8x2x32xf32, #tpu.memory_space<vmem>>, vector<1x2x32xf32>
    %90 = vector.shape_cast %89 : vector<1x2x32xf32> to vector<2x32xf32>
    %91 = arith.addf %90, %76 : vector<2x32xf32>
    %92 = arith.negf %91 : vector<2x32xf32>
    %93 = math.exp %92 : vector<2x32xf32>
    %cst_42 = arith.constant 1.000000e+00 : f32
    %94 = vector.broadcast %cst_42 : f32 to vector<2x32xf32>
    %95 = arith.addf %94, %93 : vector<2x32xf32>
    %96 = arith.divf %94, %95 : vector<2x32xf32>
    %97 = arith.index_cast %c2_i32 : i32 to index
    %c0_43 = arith.constant 0 : index
    %c0_44 = arith.constant 0 : index
    %98 = vector.load %arg2[%97, %c0_43, %c0_44] : memref<8x2x32xf32, #tpu.memory_space<vmem>>, vector<1x2x32xf32>
    %99 = vector.shape_cast %98 : vector<1x2x32xf32> to vector<2x32xf32>
    %100 = arith.mulf %87, %78 : vector<2x32xf32>
    %101 = arith.addf %99, %100 : vector<2x32xf32>
    %102 = math.tanh %101 : vector<2x32xf32>
    %103 = arith.subf %70, %102 : vector<2x32xf32>
    %104 = arith.mulf %96, %103 : vector<2x32xf32>
    %105 = arith.addf %102, %104 : vector<2x32xf32>
    %106 = arith.index_cast %c2_i32 : i32 to index
    %c0_45 = arith.constant 0 : index
    %c0_46 = arith.constant 0 : index
    %107 = vector.load %arg8[%106, %c0_45, %c0_46] : memref<8x2x32xf32, #tpu.memory_space<vmem>>, vector<1x2x32xf32>
    %108 = vector.shape_cast %107 : vector<1x2x32xf32> to vector<2x32xf32>
    %109 = vector.shape_cast %105 : vector<2x32xf32> to vector<1x2x32xf32>
    tpu.vector_store %arg8[%106, %c0_45, %c0_46], %109 {strides = array<i32>} : memref<8x2x32xf32, #tpu.memory_space<vmem>>, vector<1x2x32xf32>,
    %c3_i32 = arith.constant 3 : i32
    %cst_47 = arith.constant dense<0.000000e+00> : vector<2x32xf32>
    %110 = tpu.matmul %105, %0, %cst_47 {dimension_numbers = #tpu.dot_dimension_numbers<[1], [0], [0], [1], [0, 0, 1, 1], [], []>} : vector<2x32xf32>, vector<32x32xf32>, vector<2x32xf32> -> vector<2x32xf32>
    %cst_48 = arith.constant dense<0.000000e+00> : vector<2x32xf32>
    %111 = tpu.matmul %105, %1, %cst_48 {dimension_numbers = #tpu.dot_dimension_numbers<[1], [0], [0], [1], [0, 0, 1, 1], [], []>} : vector<2x32xf32>, vector<32x32xf32>, vector<2x32xf32> -> vector<2x32xf32>
    %cst_49 = arith.constant dense<0.000000e+00> : vector<2x32xf32>
    %112 = tpu.matmul %105, %2, %cst_49 {dimension_numbers = #tpu.dot_dimension_numbers<[1], [0], [0], [1], [0, 0, 1, 1], [], []>} : vector<2x32xf32>, vector<32x32xf32>, vector<2x32xf32> -> vector<2x32xf32>
    %113 = arith.addf %112, %3 : vector<2x32xf32>
    %114 = arith.index_cast %c3_i32 : i32 to index
    %c0_50 = arith.constant 0 : index
    %c0_51 = arith.constant 0 : index
    %115 = vector.load %arg0[%114, %c0_50, %c0_51] : memref<8x2x32xf32, #tpu.memory_space<vmem>>, vector<1x2x32xf32>
    %116 = vector.shape_cast %115 : vector<1x2x32xf32> to vector<2x32xf32>
    %117 = arith.addf %116, %110 : vector<2x32xf32>
    %118 = arith.negf %117 : vector<2x32xf32>
    %119 = math.exp %118 : vector<2x32xf32>
    %cst_52 = arith.constant 1.000000e+00 : f32
    %120 = vector.broadcast %cst_52 : f32 to vector<2x32xf32>
    %121 = arith.addf %120, %119 : vector<2x32xf32>
    %122 = arith.divf %120, %121 : vector<2x32xf32>
    %123 = arith.index_cast %c3_i32 : i32 to index
    %c0_53 = arith.constant 0 : index
    %c0_54 = arith.constant 0 : index
    %124 = vector.load %arg1[%123, %c0_53, %c0_54] : memref<8x2x32xf32, #tpu.memory_space<vmem>>, vector<1x2x32xf32>
    %125 = vector.shape_cast %124 : vector<1x2x32xf32> to vector<2x32xf32>
    %126 = arith.addf %125, %111 : vector<2x32xf32>
    %127 = arith.negf %126 : vector<2x32xf32>
    %128 = math.exp %127 : vector<2x32xf32>
    %cst_55 = arith.constant 1.000000e+00 : f32
    %129 = vector.broadcast %cst_55 : f32 to vector<2x32xf32>
    %130 = arith.addf %129, %128 : vector<2x32xf32>
    %131 = arith.divf %129, %130 : vector<2x32xf32>
    %132 = arith.index_cast %c3_i32 : i32 to index
    %c0_56 = arith.constant 0 : index
    %c0_57 = arith.constant 0 : index
    %133 = vector.load %arg2[%132, %c0_56, %c0_57] : memref<8x2x32xf32, #tpu.memory_space<vmem>>, vector<1x2x32xf32>
    %134 = vector.shape_cast %133 : vector<1x2x32xf32> to vector<2x32xf32>
    %135 = arith.mulf %122, %113 : vector<2x32xf32>
    %136 = arith.addf %134, %135 : vector<2x32xf32>
    %137 = math.tanh %136 : vector<2x32xf32>
    %138 = arith.subf %105, %137 : vector<2x32xf32>
    %139 = arith.mulf %131, %138 : vector<2x32xf32>
    %140 = arith.addf %137, %139 : vector<2x32xf32>
    %141 = arith.index_cast %c3_i32 : i32 to index
    %c0_58 = arith.constant 0 : index
    %c0_59 = arith.constant 0 : index
    %142 = vector.load %arg8[%141, %c0_58, %c0_59] : memref<8x2x32xf32, #tpu.memory_space<vmem>>, vector<1x2x32xf32>
    %143 = vector.shape_cast %142 : vector<1x2x32xf32> to vector<2x32xf32>
    %144 = vector.shape_cast %140 : vector<2x32xf32> to vector<1x2x32xf32>
    tpu.vector_store %arg8[%141, %c0_58, %c0_59], %144 {strides = array<i32>} : memref<8x2x32xf32, #tpu.memory_space<vmem>>, vector<1x2x32xf32>,
    %c4_i32 = arith.constant 4 : i32
    %cst_60 = arith.constant dense<0.000000e+00> : vector<2x32xf32>
    %145 = tpu.matmul %140, %0, %cst_60 {dimension_numbers = #tpu.dot_dimension_numbers<[1], [0], [0], [1], [0, 0, 1, 1], [], []>} : vector<2x32xf32>, vector<32x32xf32>, vector<2x32xf32> -> vector<2x32xf32>
    %cst_61 = arith.constant dense<0.000000e+00> : vector<2x32xf32>
    %146 = tpu.matmul %140, %1, %cst_61 {dimension_numbers = #tpu.dot_dimension_numbers<[1], [0], [0], [1], [0, 0, 1, 1], [], []>} : vector<2x32xf32>, vector<32x32xf32>, vector<2x32xf32> -> vector<2x32xf32>
    %cst_62 = arith.constant dense<0.000000e+00> : vector<2x32xf32>
    %147 = tpu.matmul %140, %2, %cst_62 {dimension_numbers = #tpu.dot_dimension_numbers<[1], [0], [0], [1], [0, 0, 1, 1], [], []>} : vector<2x32xf32>, vector<32x32xf32>, vector<2x32xf32> -> vector<2x32xf32>
    %148 = arith.addf %147, %3 : vector<2x32xf32>
    %149 = arith.index_cast %c4_i32 : i32 to index
    %c0_63 = arith.constant 0 : index
    %c0_64 = arith.constant 0 : index
    %150 = vector.load %arg0[%149, %c0_63, %c0_64] : memref<8x2x32xf32, #tpu.memory_space<vmem>>, vector<1x2x32xf32>
    %151 = vector.shape_cast %150 : vector<1x2x32xf32> to vector<2x32xf32>
    %152 = arith.addf %151, %145 : vector<2x32xf32>
    %153 = arith.negf %152 : vector<2x32xf32>
    %154 = math.exp %153 : vector<2x32xf32>
    %cst_65 = arith.constant 1.000000e+00 : f32
    %155 = vector.broadcast %cst_65 : f32 to vector<2x32xf32>
    %156 = arith.addf %155, %154 : vector<2x32xf32>
    %157 = arith.divf %155, %156 : vector<2x32xf32>
    %158 = arith.index_cast %c4_i32 : i32 to index
    %c0_66 = arith.constant 0 : index
    %c0_67 = arith.constant 0 : index
    %159 = vector.load %arg1[%158, %c0_66, %c0_67] : memref<8x2x32xf32, #tpu.memory_space<vmem>>, vector<1x2x32xf32>
    %160 = vector.shape_cast %159 : vector<1x2x32xf32> to vector<2x32xf32>
    %161 = arith.addf %160, %146 : vector<2x32xf32>
    %162 = arith.negf %161 : vector<2x32xf32>
    %163 = math.exp %162 : vector<2x32xf32>
    %cst_68 = arith.constant 1.000000e+00 : f32
    %164 = vector.broadcast %cst_68 : f32 to vector<2x32xf32>
    %165 = arith.addf %164, %163 : vector<2x32xf32>
    %166 = arith.divf %164, %165 : vector<2x32xf32>
    %167 = arith.index_cast %c4_i32 : i32 to index
    %c0_69 = arith.constant 0 : index
    %c0_70 = arith.constant 0 : index
    %168 = vector.load %arg2[%167, %c0_69, %c0_70] : memref<8x2x32xf32, #tpu.memory_space<vmem>>, vector<1x2x32xf32>
    %169 = vector.shape_cast %168 : vector<1x2x32xf32> to vector<2x32xf32>
    %170 = arith.mulf %157, %148 : vector<2x32xf32>
    %171 = arith.addf %169, %170 : vector<2x32xf32>
    %172 = math.tanh %171 : vector<2x32xf32>
    %173 = arith.subf %140, %172 : vector<2x32xf32>
    %174 = arith.mulf %166, %173 : vector<2x32xf32>
    %175 = arith.addf %172, %174 : vector<2x32xf32>
    %176 = arith.index_cast %c4_i32 : i32 to index
    %c0_71 = arith.constant 0 : index
    %c0_72 = arith.constant 0 : index
    %177 = vector.load %arg8[%176, %c0_71, %c0_72] : memref<8x2x32xf32, #tpu.memory_space<vmem>>, vector<1x2x32xf32>
    %178 = vector.shape_cast %177 : vector<1x2x32xf32> to vector<2x32xf32>
    %179 = vector.shape_cast %175 : vector<2x32xf32> to vector<1x2x32xf32>
    tpu.vector_store %arg8[%176, %c0_71, %c0_72], %179 {strides = array<i32>} : memref<8x2x32xf32, #tpu.memory_space<vmem>>, vector<1x2x32xf32>,
    %c5_i32 = arith.constant 5 : i32
    %cst_73 = arith.constant dense<0.000000e+00> : vector<2x32xf32>
    %180 = tpu.matmul %175, %0, %cst_73 {dimension_numbers = #tpu.dot_dimension_numbers<[1], [0], [0], [1], [0, 0, 1, 1], [], []>} : vector<2x32xf32>, vector<32x32xf32>, vector<2x32xf32> -> vector<2x32xf32>
    %cst_74 = arith.constant dense<0.000000e+00> : vector<2x32xf32>
    %181 = tpu.matmul %175, %1, %cst_74 {dimension_numbers = #tpu.dot_dimension_numbers<[1], [0], [0], [1], [0, 0, 1, 1], [], []>} : vector<2x32xf32>, vector<32x32xf32>, vector<2x32xf32> -> vector<2x32xf32>
    %cst_75 = arith.constant dense<0.000000e+00> : vector<2x32xf32>
    %182 = tpu.matmul %175, %2, %cst_75 {dimension_numbers = #tpu.dot_dimension_numbers<[1], [0], [0], [1], [0, 0, 1, 1], [], []>} : vector<2x32xf32>, vector<32x32xf32>, vector<2x32xf32> -> vector<2x32xf32>
    %183 = arith.addf %182, %3 : vector<2x32xf32>
    %184 = arith.index_cast %c5_i32 : i32 to index
    %c0_76 = arith.constant 0 : index
    %c0_77 = arith.constant 0 : index
    %185 = vector.load %arg0[%184, %c0_76, %c0_77] : memref<8x2x32xf32, #tpu.memory_space<vmem>>, vector<1x2x32xf32>
    %186 = vector.shape_cast %185 : vector<1x2x32xf32> to vector<2x32xf32>
    %187 = arith.addf %186, %180 : vector<2x32xf32>
    %188 = arith.negf %187 : vector<2x32xf32>
    %189 = math.exp %188 : vector<2x32xf32>
    %cst_78 = arith.constant 1.000000e+00 : f32
    %190 = vector.broadcast %cst_78 : f32 to vector<2x32xf32>
    %191 = arith.addf %190, %189 : vector<2x32xf32>
    %192 = arith.divf %190, %191 : vector<2x32xf32>
    %193 = arith.index_cast %c5_i32 : i32 to index
    %c0_79 = arith.constant 0 : index
    %c0_80 = arith.constant 0 : index
    %194 = vector.load %arg1[%193, %c0_79, %c0_80] : memref<8x2x32xf32, #tpu.memory_space<vmem>>, vector<1x2x32xf32>
    %195 = vector.shape_cast %194 : vector<1x2x32xf32> to vector<2x32xf32>
    %196 = arith.addf %195, %181 : vector<2x32xf32>
    %197 = arith.negf %196 : vector<2x32xf32>
    %198 = math.exp %197 : vector<2x32xf32>
    %cst_81 = arith.constant 1.000000e+00 : f32
    %199 = vector.broadcast %cst_81 : f32 to vector<2x32xf32>
    %200 = arith.addf %199, %198 : vector<2x32xf32>
    %201 = arith.divf %199, %200 : vector<2x32xf32>
    %202 = arith.index_cast %c5_i32 : i32 to index
    %c0_82 = arith.constant 0 : index
    %c0_83 = arith.constant 0 : index
    %203 = vector.load %arg2[%202, %c0_82, %c0_83] : memref<8x2x32xf32, #tpu.memory_space<vmem>>, vector<1x2x32xf32>
    %204 = vector.shape_cast %203 : vector<1x2x32xf32> to vector<2x32xf32>
    %205 = arith.mulf %192, %183 : vector<2x32xf32>
    %206 = arith.addf %204, %205 : vector<2x32xf32>
    %207 = math.tanh %206 : vector<2x32xf32>
    %208 = arith.subf %175, %207 : vector<2x32xf32>
    %209 = arith.mulf %201, %208 : vector<2x32xf32>
    %210 = arith.addf %207, %209 : vector<2x32xf32>
    %211 = arith.index_cast %c5_i32 : i32 to index
    %c0_84 = arith.constant 0 : index
    %c0_85 = arith.constant 0 : index
    %212 = vector.load %arg8[%211, %c0_84, %c0_85] : memref<8x2x32xf32, #tpu.memory_space<vmem>>, vector<1x2x32xf32>
    %213 = vector.shape_cast %212 : vector<1x2x32xf32> to vector<2x32xf32>
    %214 = vector.shape_cast %210 : vector<2x32xf32> to vector<1x2x32xf32>
    tpu.vector_store %arg8[%211, %c0_84, %c0_85], %214 {strides = array<i32>} : memref<8x2x32xf32, #tpu.memory_space<vmem>>, vector<1x2x32xf32>,
    %c6_i32 = arith.constant 6 : i32
    %cst_86 = arith.constant dense<0.000000e+00> : vector<2x32xf32>
    %215 = tpu.matmul %210, %0, %cst_86 {dimension_numbers = #tpu.dot_dimension_numbers<[1], [0], [0], [1], [0, 0, 1, 1], [], []>} : vector<2x32xf32>, vector<32x32xf32>, vector<2x32xf32> -> vector<2x32xf32>
    %cst_87 = arith.constant dense<0.000000e+00> : vector<2x32xf32>
    %216 = tpu.matmul %210, %1, %cst_87 {dimension_numbers = #tpu.dot_dimension_numbers<[1], [0], [0], [1], [0, 0, 1, 1], [], []>} : vector<2x32xf32>, vector<32x32xf32>, vector<2x32xf32> -> vector<2x32xf32>
    %cst_88 = arith.constant dense<0.000000e+00> : vector<2x32xf32>
    %217 = tpu.matmul %210, %2, %cst_88 {dimension_numbers = #tpu.dot_dimension_numbers<[1], [0], [0], [1], [0, 0, 1, 1], [], []>} : vector<2x32xf32>, vector<32x32xf32>, vector<2x32xf32> -> vector<2x32xf32>
    %218 = arith.addf %217, %3 : vector<2x32xf32>
    %219 = arith.index_cast %c6_i32 : i32 to index
    %c0_89 = arith.constant 0 : index
    %c0_90 = arith.constant 0 : index
    %220 = vector.load %arg0[%219, %c0_89, %c0_90] : memref<8x2x32xf32, #tpu.memory_space<vmem>>, vector<1x2x32xf32>
    %221 = vector.shape_cast %220 : vector<1x2x32xf32> to vector<2x32xf32>
    %222 = arith.addf %221, %215 : vector<2x32xf32>
    %223 = arith.negf %222 : vector<2x32xf32>
    %224 = math.exp %223 : vector<2x32xf32>
    %cst_91 = arith.constant 1.000000e+00 : f32
    %225 = vector.broadcast %cst_91 : f32 to vector<2x32xf32>
    %226 = arith.addf %225, %224 : vector<2x32xf32>
    %227 = arith.divf %225, %226 : vector<2x32xf32>
    %228 = arith.index_cast %c6_i32 : i32 to index
    %c0_92 = arith.constant 0 : index
    %c0_93 = arith.constant 0 : index
    %229 = vector.load %arg1[%228, %c0_92, %c0_93] : memref<8x2x32xf32, #tpu.memory_space<vmem>>, vector<1x2x32xf32>
    %230 = vector.shape_cast %229 : vector<1x2x32xf32> to vector<2x32xf32>
    %231 = arith.addf %230, %216 : vector<2x32xf32>
    %232 = arith.negf %231 : vector<2x32xf32>
    %233 = math.exp %232 : vector<2x32xf32>
    %cst_94 = arith.constant 1.000000e+00 : f32
    %234 = vector.broadcast %cst_94 : f32 to vector<2x32xf32>
    %235 = arith.addf %234, %233 : vector<2x32xf32>
    %236 = arith.divf %234, %235 : vector<2x32xf32>
    %237 = arith.index_cast %c6_i32 : i32 to index
    %c0_95 = arith.constant 0 : index
    %c0_96 = arith.constant 0 : index
    %238 = vector.load %arg2[%237, %c0_95, %c0_96] : memref<8x2x32xf32, #tpu.memory_space<vmem>>, vector<1x2x32xf32>
    %239 = vector.shape_cast %238 : vector<1x2x32xf32> to vector<2x32xf32>
    %240 = arith.mulf %227, %218 : vector<2x32xf32>
    %241 = arith.addf %239, %240 : vector<2x32xf32>
    %242 = math.tanh %241 : vector<2x32xf32>
    %243 = arith.subf %210, %242 : vector<2x32xf32>
    %244 = arith.mulf %236, %243 : vector<2x32xf32>
    %245 = arith.addf %242, %244 : vector<2x32xf32>
    %246 = arith.index_cast %c6_i32 : i32 to index
    %c0_97 = arith.constant 0 : index
    %c0_98 = arith.constant 0 : index
    %247 = vector.load %arg8[%246, %c0_97, %c0_98] : memref<8x2x32xf32, #tpu.memory_space<vmem>>, vector<1x2x32xf32>
    %248 = vector.shape_cast %247 : vector<1x2x32xf32> to vector<2x32xf32>
    %249 = vector.shape_cast %245 : vector<2x32xf32> to vector<1x2x32xf32>
    tpu.vector_store %arg8[%246, %c0_97, %c0_98], %249 {strides = array<i32>} : memref<8x2x32xf32, #tpu.memory_space<vmem>>, vector<1x2x32xf32>,
    %c7_i32 = arith.constant 7 : i32
    %cst_99 = arith.constant dense<0.000000e+00> : vector<2x32xf32>
    %250 = tpu.matmul %245, %0, %cst_99 {dimension_numbers = #tpu.dot_dimension_numbers<[1], [0], [0], [1], [0, 0, 1, 1], [], []>} : vector<2x32xf32>, vector<32x32xf32>, vector<2x32xf32> -> vector<2x32xf32>
    %cst_100 = arith.constant dense<0.000000e+00> : vector<2x32xf32>
    %251 = tpu.matmul %245, %1, %cst_100 {dimension_numbers = #tpu.dot_dimension_numbers<[1], [0], [0], [1], [0, 0, 1, 1], [], []>} : vector<2x32xf32>, vector<32x32xf32>, vector<2x32xf32> -> vector<2x32xf32>
    %cst_101 = arith.constant dense<0.000000e+00> : vector<2x32xf32>
    %252 = tpu.matmul %245, %2, %cst_101 {dimension_numbers = #tpu.dot_dimension_numbers<[1], [0], [0], [1], [0, 0, 1, 1], [], []>} : vector<2x32xf32>, vector<32x32xf32>, vector<2x32xf32> -> vector<2x32xf32>
    %253 = arith.addf %252, %3 : vector<2x32xf32>
    %254 = arith.index_cast %c7_i32 : i32 to index
    %c0_102 = arith.constant 0 : index
    %c0_103 = arith.constant 0 : index
    %255 = vector.load %arg0[%254, %c0_102, %c0_103] : memref<8x2x32xf32, #tpu.memory_space<vmem>>, vector<1x2x32xf32>
    %256 = vector.shape_cast %255 : vector<1x2x32xf32> to vector<2x32xf32>
    %257 = arith.addf %256, %250 : vector<2x32xf32>
    %258 = arith.negf %257 : vector<2x32xf32>
    %259 = math.exp %258 : vector<2x32xf32>
    %cst_104 = arith.constant 1.000000e+00 : f32
    %260 = vector.broadcast %cst_104 : f32 to vector<2x32xf32>
    %261 = arith.addf %260, %259 : vector<2x32xf32>
    %262 = arith.divf %260, %261 : vector<2x32xf32>
    %263 = arith.index_cast %c7_i32 : i32 to index
    %c0_105 = arith.constant 0 : index
    %c0_106 = arith.constant 0 : index
    %264 = vector.load %arg1[%263, %c0_105, %c0_106] : memref<8x2x32xf32, #tpu.memory_space<vmem>>, vector<1x2x32xf32>
    %265 = vector.shape_cast %264 : vector<1x2x32xf32> to vector<2x32xf32>
    %266 = arith.addf %265, %251 : vector<2x32xf32>
    %267 = arith.negf %266 : vector<2x32xf32>
    %268 = math.exp %267 : vector<2x32xf32>
    %cst_107 = arith.constant 1.000000e+00 : f32
    %269 = vector.broadcast %cst_107 : f32 to vector<2x32xf32>
    %270 = arith.addf %269, %268 : vector<2x32xf32>
    %271 = arith.divf %269, %270 : vector<2x32xf32>
    %272 = arith.index_cast %c7_i32 : i32 to index
    %c0_108 = arith.constant 0 : index
    %c0_109 = arith.constant 0 : index
    %273 = vector.load %arg2[%272, %c0_108, %c0_109] : memref<8x2x32xf32, #tpu.memory_space<vmem>>, vector<1x2x32xf32>
    %274 = vector.shape_cast %273 : vector<1x2x32xf32> to vector<2x32xf32>
    %275 = arith.mulf %262, %253 : vector<2x32xf32>
    %276 = arith.addf %274, %275 : vector<2x32xf32>
    %277 = math.tanh %276 : vector<2x32xf32>
    %278 = arith.subf %245, %277 : vector<2x32xf32>
    %279 = arith.mulf %271, %278 : vector<2x32xf32>
    %280 = arith.addf %277, %279 : vector<2x32xf32>
    %281 = arith.index_cast %c7_i32 : i32 to index
    %c0_110 = arith.constant 0 : index
    %c0_111 = arith.constant 0 : index
    %282 = vector.load %arg8[%281, %c0_110, %c0_111] : memref<8x2x32xf32, #tpu.memory_space<vmem>>, vector<1x2x32xf32>
    %283 = vector.shape_cast %282 : vector<1x2x32xf32> to vector<2x32xf32>
    %284 = vector.shape_cast %280 : vector<2x32xf32> to vector<1x2x32xf32>
    tpu.vector_store %arg8[%281, %c0_110, %c0_111], %284 {strides = array<i32>} : memref<8x2x32xf32, #tpu.memory_space<vmem>>, vector<1x2x32xf32>,
    %c8_i32 = arith.constant 8 : i32
    return
  }
}

</mosaic_0001>

<llo_original>
// kernel: rnn_forward.1
$region0: #{rnn_forward.1}
  #allocation0 [shape = 'u32[]', space=smem, size = 0x4, offset = 0x4, fixed_abs, tag = 'smem constant byte address 0x4 - core index']
  #allocation1 [shape = 'u32[144,128]{1,0:T(1,128)}', space=vmem, size = 0x12000, scoped, tag = 'internal scratch']
  %s0 = inlined_call_operand.vmem [shape: f32[8,2,32], index: 0, kind: input, shape index: {}]
  %s1 = inlined_call_operand.vmem [shape: f32[8,2,32], index: 1, kind: input, shape index: {}]
  %s2 = inlined_call_operand.vmem [shape: f32[8,2,32], index: 2, kind: input, shape index: {}]
  %s3 = inlined_call_operand.vmem [shape: f32[32,32], index: 3, kind: input, shape index: {}]
  %s4 = inlined_call_operand.vmem [shape: f32[32,32], index: 4, kind: input, shape index: {}]
  %s5 = inlined_call_operand.vmem [shape: f32[32,32], index: 5, kind: input, shape index: {}]
  %s6 = inlined_call_operand.vmem [shape: f32[2,32], index: 6, kind: input, shape index: {}]
  %s7 = inlined_call_operand.vmem [shape: f32[2,32], index: 7, kind: input, shape index: {}]
  %s8 = inlined_call_operand.vmem [shape: f32[8,2,32], index: 8, kind: output, shape index: {}]
  %s9 = sld [smem:[#allocation0]]
  $region42: #{rnn_forward.1} parent=0
    _
  %s11 = ssub.s32 1, %s9
  %s12 = scalar_select 0, %s11, %s9
  // Predicated region
  $region2: #{rnn_forward.1} parent=0 // pred_check
    _
  $region3: #{rnn_forward.1} parent=0 // pred_check_branch
    %14 = sbr.rel (0) target = $region5
  $region4: #{rnn_forward.1} parent=0 // pred_region
    _
  $region5: #{rnn_forward.1} parent=0 // pred_fallthru
    _
  // Predicated region
  $region6: #{rnn_forward.1} parent=0 // pred_check
    _
  $region7: #{rnn_forward.1} parent=0 // pred_check_branch
    %16 = sbr.rel (0) target = $region9
  $region8: #{rnn_forward.1} parent=0 // pred_region
    _
  $region9: #{rnn_forward.1} parent=0 // pred_fallthru
    _
  // Predicated region
  $region10: #{rnn_forward.1} parent=0 // pred_check
    _
  $region11: #{rnn_forward.1} parent=0 // pred_check_branch
    %18 = sbr.rel (0) target = $region13
  $region12: #{rnn_forward.1} parent=0 // pred_region
    _
  $region13: #{rnn_forward.1} parent=0 // pred_fallthru
    _
  // Predicated region
  $region14: #{rnn_forward.1} parent=0 // pred_check
    _
  $region15: #{rnn_forward.1} parent=0 // pred_check_branch
    %20 = sbr.rel (0) target = $region17
  $region16: #{rnn_forward.1} parent=0 // pred_region
    _
  $region17: #{rnn_forward.1} parent=0 // pred_fallthru
    _
  // Predicated region
  $region18: #{rnn_forward.1} parent=0 // pred_check
    _
  $region19: #{rnn_forward.1} parent=0 // pred_check_branch
    %22 = sbr.rel (0) target = $region21
  $region20: #{rnn_forward.1} parent=0 // pred_region
    _
  $region21: #{rnn_forward.1} parent=0 // pred_fallthru
    _
  // Predicated region
  $region22: #{rnn_forward.1} parent=0 // pred_check
    _
  $region23: #{rnn_forward.1} parent=0 // pred_check_branch
    %24 = sbr.rel (0) target = $region25
  $region24: #{rnn_forward.1} parent=0 // pred_region
    _
  $region25: #{rnn_forward.1} parent=0 // pred_fallthru
    _
  // Predicated region
  $region26: #{rnn_forward.1} parent=0 // pred_check
    _
  $region27: #{rnn_forward.1} parent=0 // pred_check_branch
    %26 = sbr.rel (0) target = $region29
  $region28: #{rnn_forward.1} parent=0 // pred_region
    _
  $region29: #{rnn_forward.1} parent=0 // pred_fallthru
    _
  // Predicated region
  $region30: #{rnn_forward.1} parent=0 // pred_check
    _
  $region31: #{rnn_forward.1} parent=0 // pred_check_branch
    %28 = sbr.rel (0) target = $region33
  $region32: #{rnn_forward.1} parent=0 // pred_region
    _
  $region33: #{rnn_forward.1} parent=0 // pred_fallthru
    _
  %v29 = vld [vmem:[%s3] sm:$0xff]
  %v30 = vld [vmem:[%s3 + $0x8] sm:$0xff]
  %v31 = vld [vmem:[%s3 + $0x10] sm:$0xff]
  %v32 = vld [vmem:[%s3 + $0x18] sm:$0xff]
  %v33 = vld [vmem:[%s4] sm:$0xff]
  %v34 = vld [vmem:[%s4 + $0x8] sm:$0xff]
  %v35 = vld [vmem:[%s4 + $0x10] sm:$0xff]
  %v36 = vld [vmem:[%s4 + $0x18] sm:$0xff]
  %v37 = vld [vmem:[%s5] sm:$0xff]
  %v38 = vld [vmem:[%s5 + $0x8] sm:$0xff]
  %v39 = vld [vmem:[%s5 + $0x10] sm:$0xff]
  %v40 = vld [vmem:[%s5 + $0x18] sm:$0xff]
  %v41 = vld [vmem:[%s6] sm:$0x3]
  %v42 = vld [vmem:[%s7] sm:$0x3]
  %vm43 = vcmask 261120
  %v45 = vsel %vm43, %v42, 0
  %47 = vmatprep.subr.mxu0 0.0
  %48 = vmatpush1.msra.mxu0 %v29
  %49 = vmatprep.subr.mxu0 0.0
  %50 = vmatpush1.msra.mxu0 %v30
  %51 = vmatprep.subr.mxu0 0.0
  %52 = vmatpush1.msra.mxu0 %v31
  %53 = vmatprep.subr.mxu0 0.0
  %54 = vmatpush1.msra.mxu0 %v32
  %55 = vmatprep.subr.mxu0 0.0
  %56 = vmatpush1.msra.mxu0 0.0
  %57 = vmatprep.subr.mxu0 0.0
  %58 = vmatpush1.msra.mxu0 0.0
  %59 = vmatprep.subr.mxu0 0.0
  %60 = vmatpush1.msra.mxu0 0.0
  %61 = vmatprep.subr.mxu0 0.0
  %62 = vmatpush1.msra.mxu0 0.0
  %63 = vmatprep.subr.mxu0 0.0
  %64 = vmatpush1.msra.mxu0 0.0
  %65 = vmatprep.subr.mxu0 0.0
  %66 = vmatpush1.msra.mxu0 0.0
  %67 = vmatprep.subr.mxu0 0.0
  %68 = vmatpush1.msra.mxu0 0.0
  %69 = vmatprep.subr.mxu0 0.0
  %70 = vmatpush1.msra.mxu0 0.0
  %71 = vmatprep.subr.mxu0 0.0
  %72 = vmatpush1.msra.mxu0 0.0
  %73 = vmatprep.subr.mxu0 0.0
  %74 = vmatpush1.msra.mxu0 0.0
  %75 = vmatprep.subr.mxu0 0.0
  %76 = vmatpush1.msra.mxu0 0.0
  %77 = vmatprep.subr.mxu0 0.0
  %78 = vmatpush1.msra.mxu0 0.0
  %79 = vmatprep.subr.mxu0 0.0
  %80 = vmatpush1.msra.mxu0 0.0
  %81 = vmatprep.subr.mxu0 0.0
  %82 = vmatpush1.msra.mxu0 0.0
  %83 = vmatprep.subr.mxu0 0.0
  %84 = vmatpush1.msra.mxu0 0.0
  %85 = vmatprep.subr.mxu0 0.0
  %86 = vmatpush1.msra.mxu0 0.0
  %87 = vmatprep.subr.mxu0 0.0
  %88 = vmatpush1.msra.mxu0 0.0
  %89 = vmatprep.subr.mxu0 0.0
  %90 = vmatpush1.msra.mxu0 0.0
  %91 = vmatprep.subr.mxu0 0.0
  %92 = vmatpush1.msra.mxu0 0.0
  %93 = vmatprep.subr.mxu0 0.0
  %94 = vmatpush1.msra.mxu0 0.0
  %95 = vmatprep.subr.mxu0 0.0
  %96 = vmatpush1.msra.mxu0 0.0
  %97 = vmatprep.subr.mxu0 0.0
  %98 = vmatpush1.msra.mxu0 0.0
  %99 = vmatprep.subr.mxu0 0.0
  %100 = vmatpush1.msra.mxu0 0.0
  %101 = vmatprep.subr.mxu0 0.0
  %102 = vmatpush1.msra.mxu0 0.0
  %103 = vmatprep.subr.mxu0 0.0
  %104 = vmatpush1.msra.mxu0 0.0
  %105 = vmatprep.subr.mxu0 0.0
  %106 = vmatpush1.msra.mxu0 0.0
  %107 = vmatprep.subr.mxu0 0.0
  %108 = vmatpush1.msra.mxu0 0.0
  %109 = vmatprep.subr.mxu0 0.0
  %110 = vmatpush1.msra.mxu0 0.0
  %111 = vmatprep.mubr.f32.mxu0 0.0
  %112 = vmatmul.mubr.f32.gmra.mrb[0].mxu0 %v45
  %v113 = vpop.f32.mrb[0].mxu0
  %v114 = vadd.f32 0.0, %v113
  %v115 = vpop.f32.mrb[0].mxu0
  %116 = vdwg.mxu0
  %117 = vmatprep.subr.mxu0 0.0
  %118 = vmatpush1.msra.mxu0 %v33
  %119 = vmatprep.subr.mxu0 0.0
  %120 = vmatpush1.msra.mxu0 %v34
  %121 = vmatprep.subr.mxu0 0.0
  %122 = vmatpush1.msra.mxu0 %v35
  %123 = vmatprep.subr.mxu0 0.0
  %124 = vmatpush1.msra.mxu0 %v36
  %125 = vmatprep.subr.mxu0 0.0
  %126 = vmatpush1.msra.mxu0 0.0
  %127 = vmatprep.subr.mxu0 0.0
  %128 = vmatpush1.msra.mxu0 0.0
  %129 = vmatprep.subr.mxu0 0.0
  %130 = vmatpush1.msra.mxu0 0.0
  %131 = vmatprep.subr.mxu0 0.0
  %132 = vmatpush1.msra.mxu0 0.0
  %133 = vmatprep.subr.mxu0 0.0
  %134 = vmatpush1.msra.mxu0 0.0
  %135 = vmatprep.subr.mxu0 0.0
  %136 = vmatpush1.msra.mxu0 0.0
  %137 = vmatprep.subr.mxu0 0.0
  %138 = vmatpush1.msra.mxu0 0.0
  %139 = vmatprep.subr.mxu0 0.0
  %140 = vmatpush1.msra.mxu0 0.0
  %141 = vmatprep.subr.mxu0 0.0
  %142 = vmatpush1.msra.mxu0 0.0
  %143 = vmatprep.subr.mxu0 0.0
  %144 = vmatpush1.msra.mxu0 0.0
  %145 = vmatprep.subr.mxu0 0.0
  %146 = vmatpush1.msra.mxu0 0.0
  %147 = vmatprep.subr.mxu0 0.0
  %148 = vmatpush1.msra.mxu0 0.0
  %149 = vmatprep.subr.mxu0 0.0
  %150 = vmatpush1.msra.mxu0 0.0
  %151 = vmatprep.subr.mxu0 0.0
  %152 = vmatpush1.msra.mxu0 0.0
  %153 = vmatprep.subr.mxu0 0.0
  %154 = vmatpush1.msra.mxu0 0.0
  %155 = vmatprep.subr.mxu0 0.0
  %156 = vmatpush1.msra.mxu0 0.0
  %157 = vmatprep.subr.mxu0 0.0
  %158 = vmatpush1.msra.mxu0 0.0
  %159 = vmatprep.subr.mxu0 0.0
  %160 = vmatpush1.msra.mxu0 0.0
  %161 = vmatprep.subr.mxu0 0.0
  %162 = vmatpush1.msra.mxu0 0.0
  %163 = vmatprep.subr.mxu0 0.0
  %164 = vmatpush1.msra.mxu0 0.0
  %165 = vmatprep.subr.mxu0 0.0
  %166 = vmatpush1.msra.mxu0 0.0
  %167 = vmatprep.subr.mxu0 0.0
  %168 = vmatpush1.msra.mxu0 0.0
  %169 = vmatprep.subr.mxu0 0.0
  %170 = vmatpush1.msra.mxu0 0.0
  %171 = vmatprep.subr.mxu0 0.0
  %172 = vmatpush1.msra.mxu0 0.0
  %173 = vmatprep.subr.mxu0 0.0
  %174 = vmatpush1.msra.mxu0 0.0
  %175 = vmatprep.subr.mxu0 0.0
  %176 = vmatpush1.msra.mxu0 0.0
  %177 = vmatprep.subr.mxu0 0.0
  %178 = vmatpush1.msra.mxu0 0.0
  %179 = vmatprep.subr.mxu0 0.0
  %180 = vmatpush1.msra.mxu0 0.0
  %181 = vmatprep.mubr.f32.mxu0 0.0
  %182 = vmatmul.mubr.f32.gmra.mrb[0].mxu0 %v45
  %v183 = vpop.f32.mrb[0].mxu0
  %v184 = vadd.f32 0.0, %v183
  %v185 = vpop.f32.mrb[0].mxu0
  %186 = vdwg.mxu0
  %187 = vmatprep.subr.mxu0 0.0
  %188 = vmatpush1.msra.mxu0 %v37
  %189 = vmatprep.subr.mxu0 0.0
  %190 = vmatpush1.msra.mxu0 %v38
  %191 = vmatprep.subr.mxu0 0.0
  %192 = vmatpush1.msra.mxu0 %v39
  %193 = vmatprep.subr.mxu0 0.0
  %194 = vmatpush1.msra.mxu0 %v40
  %195 = vmatprep.subr.mxu0 0.0
  %196 = vmatpush1.msra.mxu0 0.0
  %197 = vmatprep.subr.mxu0 0.0
  %198 = vmatpush1.msra.mxu0 0.0
  %199 = vmatprep.subr.mxu0 0.0
  %200 = vmatpush1.msra.mxu0 0.0
  %201 = vmatprep.subr.mxu0 0.0
  %202 = vmatpush1.msra.mxu0 0.0
  %203 = vmatprep.subr.mxu0 0.0
  %204 = vmatpush1.msra.mxu0 0.0
  %205 = vmatprep.subr.mxu0 0.0
  %206 = vmatpush1.msra.mxu0 0.0
  %207 = vmatprep.subr.mxu0 0.0
  %208 = vmatpush1.msra.mxu0 0.0
  %209 = vmatprep.subr.mxu0 0.0
  %210 = vmatpush1.msra.mxu0 0.0
  %211 = vmatprep.subr.mxu0 0.0
  %212 = vmatpush1.msra.mxu0 0.0
  %213 = vmatprep.subr.mxu0 0.0
  %214 = vmatpush1.msra.mxu0 0.0
  %215 = vmatprep.subr.mxu0 0.0
  %216 = vmatpush1.msra.mxu0 0.0
  %217 = vmatprep.subr.mxu0 0.0
  %218 = vmatpush1.msra.mxu0 0.0
  %219 = vmatprep.subr.mxu0 0.0
  %220 = vmatpush1.msra.mxu0 0.0
  %221 = vmatprep.subr.mxu0 0.0
  %222 = vmatpush1.msra.mxu0 0.0
  %223 = vmatprep.subr.mxu0 0.0
  %224 = vmatpush1.msra.mxu0 0.0
  %225 = vmatprep.subr.mxu0 0.0
  %226 = vmatpush1.msra.mxu0 0.0
  %227 = vmatprep.subr.mxu0 0.0
  %228 = vmatpush1.msra.mxu0 0.0
  %229 = vmatprep.subr.mxu0 0.0
  %230 = vmatpush1.msra.mxu0 0.0
  %231 = vmatprep.subr.mxu0 0.0
  %232 = vmatpush1.msra.mxu0 0.0
  %233 = vmatprep.subr.mxu0 0.0
  %234 = vmatpush1.msra.mxu0 0.0
  %235 = vmatprep.subr.mxu0 0.0
  %236 = vmatpush1.msra.mxu0 0.0
  %237 = vmatprep.subr.mxu0 0.0
  %238 = vmatpush1.msra.mxu0 0.0
  %239 = vmatprep.subr.mxu0 0.0
  %240 = vmatpush1.msra.mxu0 0.0
  %241 = vmatprep.subr.mxu0 0.0
  %242 = vmatpush1.msra.mxu0 0.0
  %243 = vmatprep.subr.mxu0 0.0
  %244 = vmatpush1.msra.mxu0 0.0
  %245 = vmatprep.subr.mxu0 0.0
  %246 = vmatpush1.msra.mxu0 0.0
  %247 = vmatprep.subr.mxu0 0.0
  %248 = vmatpush1.msra.mxu0 0.0
  %249 = vmatprep.subr.mxu0 0.0
  %250 = vmatpush1.msra.mxu0 0.0
  %251 = vmatprep.mubr.f32.mxu0 0.0
  %252 = vmatmul.mubr.f32.gmra.mrb[0].mxu0 %v45
  %v253 = vpop.f32.mrb[0].mxu0
  %v254 = vadd.f32 %v41, %v253
  %v255 = vpop.f32.mrb[0].mxu0
  %256 = vdwg.mxu0
  %v257 = vld [vmem:[%s0] sm:$0x3]
  %v258 = vadd.f32 %v257, %v114
  %v259 = vxor.u32 %v258, 2147483648
  %v260 = vmul.f32 %v259, 1.442695
  %v261 = vpow.pop %v260
  %v262 = vadd.f32 %v261, 1.0
  %v263 = vrcp.pop %v262
  %v264 = vmul.f32 1.0, %v263
  %v265 = vld [vmem:[%s1] sm:$0x3]
  %v266 = vadd.f32 %v265, %v184
  %v267 = vxor.u32 %v266, 2147483648
  %v268 = vmul.f32 %v267, 1.442695
  %v269 = vpow.pop %v268
  %v270 = vadd.f32 %v269, 1.0
  %v271 = vrcp.pop %v270
  %v272 = vmul.f32 1.0, %v271
  %v273 = vld [vmem:[%s2] sm:$0x3]
  %v274 = vmul.f32 %v264, %v254
  %v275 = vadd.f32 %v273, %v274
  %v276 = vtanh.pop %v275
  %v277 = vsub.f32 %v42, %v276
  %v278 = vmul.f32 %v272, %v277
  %v279 = vadd.f32 %v276, %v278
  %vm280 = vcmask 254976
  %281 = vst.msk [vmem:[%s8] sm:$0x3] %vm280, %v279
  %v283 = vsel %vm43, %v279, 0
  %285 = vmatprep.subr.mxu0 0.0
  %286 = vmatpush1.msra.mxu0 %v29
  %287 = vmatprep.subr.mxu0 0.0
  %288 = vmatpush1.msra.mxu0 %v30
  %289 = vmatprep.subr.mxu0 0.0
  %290 = vmatpush1.msra.mxu0 %v31
  %291 = vmatprep.subr.mxu0 0.0
  %292 = vmatpush1.msra.mxu0 %v32
  %293 = vmatprep.subr.mxu0 0.0
  %294 = vmatpush1.msra.mxu0 0.0
  %295 = vmatprep.subr.mxu0 0.0
  %296 = vmatpush1.msra.mxu0 0.0
  %297 = vmatprep.subr.mxu0 0.0
  %298 = vmatpush1.msra.mxu0 0.0
  %299 = vmatprep.subr.mxu0 0.0
  %300 = vmatpush1.msra.mxu0 0.0
  %301 = vmatprep.subr.mxu0 0.0
  %302 = vmatpush1.msra.mxu0 0.0
  %303 = vmatprep.subr.mxu0 0.0
  %304 = vmatpush1.msra.mxu0 0.0
  %305 = vmatprep.subr.mxu0 0.0
  %306 = vmatpush1.msra.mxu0 0.0
  %307 = vmatprep.subr.mxu0 0.0
  %308 = vmatpush1.msra.mxu0 0.0
  %309 = vmatprep.subr.mxu0 0.0
  %310 = vmatpush1.msra.mxu0 0.0
  %311 = vmatprep.subr.mxu0 0.0
  %312 = vmatpush1.msra.mxu0 0.0
  %313 = vmatprep.subr.mxu0 0.0
  %314 = vmatpush1.msra.mxu0 0.0
  %315 = vmatprep.subr.mxu0 0.0
  %316 = vmatpush1.msra.mxu0 0.0
  %317 = vmatprep.subr.mxu0 0.0
  %318 = vmatpush1.msra.mxu0 0.0
  %319 = vmatprep.subr.mxu0 0.0
  %320 = vmatpush1.msra.mxu0 0.0
  %321 = vmatprep.subr.mxu0 0.0
  %322 = vmatpush1.msra.mxu0 0.0
  %323 = vmatprep.subr.mxu0 0.0
  %324 = vmatpush1.msra.mxu0 0.0
  %325 = vmatprep.subr.mxu0 0.0
  %326 = vmatpush1.msra.mxu0 0.0
  %327 = vmatprep.subr.mxu0 0.0
  %328 = vmatpush1.msra.mxu0 0.0
  %329 = vmatprep.subr.mxu0 0.0
  %330 = vmatpush1.msra.mxu0 0.0
  %331 = vmatprep.subr.mxu0 0.0
  %332 = vmatpush1.msra.mxu0 0.0
  %333 = vmatprep.subr.mxu0 0.0
  %334 = vmatpush1.msra.mxu0 0.0
  %335 = vmatprep.subr.mxu0 0.0
  %336 = vmatpush1.msra.mxu0 0.0
  %337 = vmatprep.subr.mxu0 0.0
  %338 = vmatpush1.msra.mxu0 0.0
  %339 = vmatprep.subr.mxu0 0.0
  %340 = vmatpush1.msra.mxu0 0.0
  %341 = vmatprep.subr.mxu0 0.0
  %342 = vmatpush1.msra.mxu0 0.0
  %343 = vmatprep.subr.mxu0 0.0
  %344 = vmatpush1.msra.mxu0 0.0
  %345 = vmatprep.subr.mxu0 0.0
  %346 = vmatpush1.msra.mxu0 0.0
  %347 = vmatprep.subr.mxu0 0.0
  %348 = vmatpush1.msra.mxu0 0.0
  %349 = vmatprep.mubr.f32.mxu0 0.0
  %350 = vmatmul.mubr.f32.gmra.mrb[0].mxu0 %v283
  %v351 = vpop.f32.mrb[0].mxu0
  %v352 = vadd.f32 0.0, %v351
  %v353 = vpop.f32.mrb[0].mxu0
  %354 = vdwg.mxu0
  %355 = vmatprep.subr.mxu0 0.0
  %356 = vmatpush1.msra.mxu0 %v33
  %357 = vmatprep.subr.mxu0 0.0
  %358 = vmatpush1.msra.mxu0 %v34
  %359 = vmatprep.subr.mxu0 0.0
  %360 = vmatpush1.msra.mxu0 %v35
  %361 = vmatprep.subr.mxu0 0.0
  %362 = vmatpush1.msra.mxu0 %v36
  %363 = vmatprep.subr.mxu0 0.0
  %364 = vmatpush1.msra.mxu0 0.0
  %365 = vmatprep.subr.mxu0 0.0
  %366 = vmatpush1.msra.mxu0 0.0
  %367 = vmatprep.subr.mxu0 0.0
  %368 = vmatpush1.msra.mxu0 0.0
  %369 = vmatprep.subr.mxu0 0.0
  %370 = vmatpush1.msra.mxu0 0.0
  %371 = vmatprep.subr.mxu0 0.0
  %372 = vmatpush1.msra.mxu0 0.0
  %373 = vmatprep.subr.mxu0 0.0
  %374 = vmatpush1.msra.mxu0 0.0
  %375 = vmatprep.subr.mxu0 0.0
  %376 = vmatpush1.msra.mxu0 0.0
  %377 = vmatprep.subr.mxu0 0.0
  %378 = vmatpush1.msra.mxu0 0.0
  %379 = vmatprep.subr.mxu0 0.0
  %380 = vmatpush1.msra.mxu0 0.0
  %381 = vmatprep.subr.mxu0 0.0
  %382 = vmatpush1.msra.mxu0 0.0
  %383 = vmatprep.subr.mxu0 0.0
  %384 = vmatpush1.msra.mxu0 0.0
  %385 = vmatprep.subr.mxu0 0.0
  %386 = vmatpush1.msra.mxu0 0.0
  %387 = vmatprep.subr.mxu0 0.0
  %388 = vmatpush1.msra.mxu0 0.0
  %389 = vmatprep.subr.mxu0 0.0
  %390 = vmatpush1.msra.mxu0 0.0
  %391 = vmatprep.subr.mxu0 0.0
  %392 = vmatpush1.msra.mxu0 0.0
  %393 = vmatprep.subr.mxu0 0.0
  %394 = vmatpush1.msra.mxu0 0.0
  %395 = vmatprep.subr.mxu0 0.0
  %396 = vmatpush1.msra.mxu0 0.0
  %397 = vmatprep.subr.mxu0 0.0
  %398 = vmatpush1.msra.mxu0 0.0
  %399 = vmatprep.subr.mxu0 0.0
  %400 = vmatpush1.msra.mxu0 0.0
  %401 = vmatprep.subr.mxu0 0.0
  %402 = vmatpush1.msra.mxu0 0.0
  %403 = vmatprep.subr.mxu0 0.0
  %404 = vmatpush1.msra.mxu0 0.0
  %405 = vmatprep.subr.mxu0 0.0
  %406 = vmatpush1.msra.mxu0 0.0
  %407 = vmatprep.subr.mxu0 0.0
  %408 = vmatpush1.msra.mxu0 0.0
  %409 = vmatprep.subr.mxu0 0.0
  %410 = vmatpush1.msra.mxu0 0.0
  %411 = vmatprep.subr.mxu0 0.0
  %412 = vmatpush1.msra.mxu0 0.0
  %413 = vmatprep.subr.mxu0 0.0
  %414 = vmatpush1.msra.mxu0 0.0
  %415 = vmatprep.subr.mxu0 0.0
  %416 = vmatpush1.msra.mxu0 0.0
  %417 = vmatprep.subr.mxu0 0.0
  %418 = vmatpush1.msra.mxu0 0.0
  %419 = vmatprep.mubr.f32.mxu0 0.0
  %420 = vmatmul.mubr.f32.gmra.mrb[0].mxu0 %v283
  %v421 = vpop.f32.mrb[0].mxu0
  %v422 = vadd.f32 0.0, %v421
  %v423 = vpop.f32.mrb[0].mxu0
  %424 = vdwg.mxu0
  %425 = vmatprep.subr.mxu0 0.0
  %426 = vmatpush1.msra.mxu0 %v37
  %427 = vmatprep.subr.mxu0 0.0
  %428 = vmatpush1.msra.mxu0 %v38
  %429 = vmatprep.subr.mxu0 0.0
  %430 = vmatpush1.msra.mxu0 %v39
  %431 = vmatprep.subr.mxu0 0.0
  %432 = vmatpush1.msra.mxu0 %v40
  %433 = vmatprep.subr.mxu0 0.0
  %434 = vmatpush1.msra.mxu0 0.0
  %435 = vmatprep.subr.mxu0 0.0
  %436 = vmatpush1.msra.mxu0 0.0
  %437 = vmatprep.subr.mxu0 0.0
  %438 = vmatpush1.msra.mxu0 0.0
  %439 = vmatprep.subr.mxu0 0.0
  %440 = vmatpush1.msra.mxu0 0.0
  %441 = vmatprep.subr.mxu0 0.0
  %442 = vmatpush1.msra.mxu0 0.0
  %443 = vmatprep.subr.mxu0 0.0
  %444 = vmatpush1.msra.mxu0 0.0
  %445 = vmatprep.subr.mxu0 0.0
  %446 = vmatpush1.msra.mxu0 0.0
  %447 = vmatprep.subr.mxu0 0.0
  %448 = vmatpush1.msra.mxu0 0.0
  %449 = vmatprep.subr.mxu0 0.0
  %450 = vmatpush1.msra.mxu0 0.0
  %451 = vmatprep.subr.mxu0 0.0
  %452 = vmatpush1.msra.mxu0 0.0
  %453 = vmatprep.subr.mxu0 0.0
  %454 = vmatpush1.msra.mxu0 0.0
  %455 = vmatprep.subr.mxu0 0.0
  %456 = vmatpush1.msra.mxu0 0.0
  %457 = vmatprep.subr.mxu0 0.0
  %458 = vmatpush1.msra.mxu0 0.0
  %459 = vmatprep.subr.mxu0 0.0
  %460 = vmatpush1.msra.mxu0 0.0
  %461 = vmatprep.subr.mxu0 0.0
  %462 = vmatpush1.msra.mxu0 0.0
  %463 = vmatprep.subr.mxu0 0.0
  %464 = vmatpush1.msra.mxu0 0.0
  %465 = vmatprep.subr.mxu0 0.0
  %466 = vmatpush1.msra.mxu0 0.0
  %467 = vmatprep.subr.mxu0 0.0
  %468 = vmatpush1.msra.mxu0 0.0
  %469 = vmatprep.subr.mxu0 0.0
  %470 = vmatpush1.msra.mxu0 0.0
  %471 = vmatprep.subr.mxu0 0.0
  %472 = vmatpush1.msra.mxu0 0.0
  %473 = vmatprep.subr.mxu0 0.0
  %474 = vmatpush1.msra.mxu0 0.0
  %475 = vmatprep.subr.mxu0 0.0
  %476 = vmatpush1.msra.mxu0 0.0
  %477 = vmatprep.subr.mxu0 0.0
  %478 = vmatpush1.msra.mxu0 0.0
  %479 = vmatprep.subr.mxu0 0.0
  %480 = vmatpush1.msra.mxu0 0.0
  %481 = vmatprep.subr.mxu0 0.0
  %482 = vmatpush1.msra.mxu0 0.0
  %483 = vmatprep.subr.mxu0 0.0
  %484 = vmatpush1.msra.mxu0 0.0
  %485 = vmatprep.subr.mxu0 0.0
  %486 = vmatpush1.msra.mxu0 0.0
  %487 = vmatprep.subr.mxu0 0.0
  %488 = vmatpush1.msra.mxu0 0.0
  %489 = vmatprep.mubr.f32.mxu0 0.0
  %490 = vmatmul.mubr.f32.gmra.mrb[0].mxu0 %v283
  %v491 = vpop.f32.mrb[0].mxu0
  %v492 = vadd.f32 %v41, %v491
  %v493 = vpop.f32.mrb[0].mxu0
  %494 = vdwg.mxu0
  %s495 = scalar_lea.vmem %s0, 2
  %v496 = vld [vmem:[%s495] sm:$0x3]
  %v497 = vadd.f32 %v496, %v352
  %v498 = vxor.u32 %v497, 2147483648
  %v499 = vmul.f32 %v498, 1.442695
  %v500 = vpow.pop %v499
  %v501 = vadd.f32 %v500, 1.0
  %v502 = vrcp.pop %v501
  %v503 = vmul.f32 1.0, %v502
  %s504 = scalar_lea.vmem %s1, 2
  %v505 = vld [vmem:[%s504] sm:$0x3]
  %v506 = vadd.f32 %v505, %v422
  %v507 = vxor.u32 %v506, 2147483648
  %v508 = vmul.f32 %v507, 1.442695
  %v509 = vpow.pop %v508
  %v510 = vadd.f32 %v509, 1.0
  %v511 = vrcp.pop %v510
  %v512 = vmul.f32 1.0, %v511
  %s513 = scalar_lea.vmem %s2, 2
  %v514 = vld [vmem:[%s513] sm:$0x3]
  %v515 = vmul.f32 %v503, %v492
  %v516 = vadd.f32 %v514, %v515
  %v517 = vtanh.pop %v516
  %v518 = vsub.f32 %v279, %v517
  %v519 = vmul.f32 %v512, %v518
  %v520 = vadd.f32 %v517, %v519
  %s521 = scalar_lea.vmem %s8, 2
  %522 = vst.msk [vmem:[%s521] sm:$0x3] %vm280, %v520
  %v524 = vsel %vm43, %v520, 0
  %526 = vmatprep.subr.mxu0 0.0
  %527 = vmatpush1.msra.mxu0 %v29
  %528 = vmatprep.subr.mxu0 0.0
  %529 = vmatpush1.msra.mxu0 %v30
  %530 = vmatprep.subr.mxu0 0.0
  %531 = vmatpush1.msra.mxu0 %v31
  %532 = vmatprep.subr.mxu0 0.0
  %533 = vmatpush1.msra.mxu0 %v32
  %534 = vmatprep.subr.mxu0 0.0
  %535 = vmatpush1.msra.mxu0 0.0
  %536 = vmatprep.subr.mxu0 0.0
  %537 = vmatpush1.msra.mxu0 0.0
  %538 = vmatprep.subr.mxu0 0.0
  %539 = vmatpush1.msra.mxu0 0.0
  %540 = vmatprep.subr.mxu0 0.0
  %541 = vmatpush1.msra.mxu0 0.0
  %542 = vmatprep.subr.mxu0 0.0
  %543 = vmatpush1.msra.mxu0 0.0
  %544 = vmatprep.subr.mxu0 0.0
  %545 = vmatpush1.msra.mxu0 0.0
  %546 = vmatprep.subr.mxu0 0.0
  %547 = vmatpush1.msra.mxu0 0.0
  %548 = vmatprep.subr.mxu0 0.0
  %549 = vmatpush1.msra.mxu0 0.0
  %550 = vmatprep.subr.mxu0 0.0
  %551 = vmatpush1.msra.mxu0 0.0
  %552 = vmatprep.subr.mxu0 0.0
  %553 = vmatpush1.msra.mxu0 0.0
  %554 = vmatprep.subr.mxu0 0.0
  %555 = vmatpush1.msra.mxu0 0.0
  %556 = vmatprep.subr.mxu0 0.0
  %557 = vmatpush1.msra.mxu0 0.0
  %558 = vmatprep.subr.mxu0 0.0
  %559 = vmatpush1.msra.mxu0 0.0
  %560 = vmatprep.subr.mxu0 0.0
  %561 = vmatpush1.msra.mxu0 0.0
  %562 = vmatprep.subr.mxu0 0.0
  %563 = vmatpush1.msra.mxu0 0.0
  %564 = vmatprep.subr.mxu0 0.0
  %565 = vmatpush1.msra.mxu0 0.0
  %566 = vmatprep.subr.mxu0 0.0
  %567 = vmatpush1.msra.mxu0 0.0
  %568 = vmatprep.subr.mxu0 0.0
  %569 = vmatpush1.msra.mxu0 0.0
  %570 = vmatprep.subr.mxu0 0.0
  %571 = vmatpush1.msra.mxu0 0.0
  %572 = vmatprep.subr.mxu0 0.0
  %573 = vmatpush1.msra.mxu0 0.0
  %574 = vmatprep.subr.mxu0 0.0
  %575 = vmatpush1.msra.mxu0 0.0
  %576 = vmatprep.subr.mxu0 0.0
  %577 = vmatpush1.msra.mxu0 0.0
  %578 = vmatprep.subr.mxu0 0.0
  %579 = vmatpush1.msra.mxu0 0.0
  %580 = vmatprep.subr.mxu0 0.0
  %581 = vmatpush1.msra.mxu0 0.0
  %582 = vmatprep.subr.mxu0 0.0
  %583 = vmatpush1.msra.mxu0 0.0
  %584 = vmatprep.subr.mxu0 0.0
  %585 = vmatpush1.msra.mxu0 0.0
  %586 = vmatprep.subr.mxu0 0.0
  %587 = vmatpush1.msra.mxu0 0.0
  %588 = vmatprep.subr.mxu0 0.0
  %589 = vmatpush1.msra.mxu0 0.0
  %590 = vmatprep.mubr.f32.mxu0 0.0
  %591 = vmatmul.mubr.f32.gmra.mrb[0].mxu0 %v524
  %v592 = vpop.f32.mrb[0].mxu0
  %v593 = vadd.f32 0.0, %v592
  %v594 = vpop.f32.mrb[0].mxu0
  %595 = vdwg.mxu0
  %596 = vmatprep.subr.mxu0 0.0
  %597 = vmatpush1.msra.mxu0 %v33
  %598 = vmatprep.subr.mxu0 0.0
  %599 = vmatpush1.msra.mxu0 %v34
  %600 = vmatprep.subr.mxu0 0.0
  %601 = vmatpush1.msra.mxu0 %v35
  %602 = vmatprep.subr.mxu0 0.0
  %603 = vmatpush1.msra.mxu0 %v36
  %604 = vmatprep.subr.mxu0 0.0
  %605 = vmatpush1.msra.mxu0 0.0
  %606 = vmatprep.subr.mxu0 0.0
  %607 = vmatpush1.msra.mxu0 0.0
  %608 = vmatprep.subr.mxu0 0.0
  %609 = vmatpush1.msra.mxu0 0.0
  %610 = vmatprep.subr.mxu0 0.0
  %611 = vmatpush1.msra.mxu0 0.0
  %612 = vmatprep.subr.mxu0 0.0
  %613 = vmatpush1.msra.mxu0 0.0
  %614 = vmatprep.subr.mxu0 0.0
  %615 = vmatpush1.msra.mxu0 0.0
  %616 = vmatprep.subr.mxu0 0.0
  %617 = vmatpush1.msra.mxu0 0.0
  %618 = vmatprep.subr.mxu0 0.0
  %619 = vmatpush1.msra.mxu0 0.0
  %620 = vmatprep.subr.mxu0 0.0
  %621 = vmatpush1.msra.mxu0 0.0
  %622 = vmatprep.subr.mxu0 0.0
  %623 = vmatpush1.msra.mxu0 0.0
  %624 = vmatprep.subr.mxu0 0.0
  %625 = vmatpush1.msra.mxu0 0.0
  %626 = vmatprep.subr.mxu0 0.0
  %627 = vmatpush1.msra.mxu0 0.0
  %628 = vmatprep.subr.mxu0 0.0
  %629 = vmatpush1.msra.mxu0 0.0
  %630 = vmatprep.subr.mxu0 0.0
  %631 = vmatpush1.msra.mxu0 0.0
  %632 = vmatprep.subr.mxu0 0.0
  %633 = vmatpush1.msra.mxu0 0.0
  %634 = vmatprep.subr.mxu0 0.0
  %635 = vmatpush1.msra.mxu0 0.0
  %636 = vmatprep.subr.mxu0 0.0
  %637 = vmatpush1.msra.mxu0 0.0
  %638 = vmatprep.subr.mxu0 0.0
  %639 = vmatpush1.msra.mxu0 0.0
  %640 = vmatprep.subr.mxu0 0.0
  %641 = vmatpush1.msra.mxu0 0.0
  %642 = vmatprep.subr.mxu0 0.0
  %643 = vmatpush1.msra.mxu0 0.0
  %644 = vmatprep.subr.mxu0 0.0
  %645 = vmatpush1.msra.mxu0 0.0
  %646 = vmatprep.subr.mxu0 0.0
  %647 = vmatpush1.msra.mxu0 0.0
  %648 = vmatprep.subr.mxu0 0.0
  %649 = vmatpush1.msra.mxu0 0.0
  %650 = vmatprep.subr.mxu0 0.0
  %651 = vmatpush1.msra.mxu0 0.0
  %652 = vmatprep.subr.mxu0 0.0
  %653 = vmatpush1.msra.mxu0 0.0
  %654 = vmatprep.subr.mxu0 0.0
  %655 = vmatpush1.msra.mxu0 0.0
  %656 = vmatprep.subr.mxu0 0.0
  %657 = vmatpush1.msra.mxu0 0.0
  %658 = vmatprep.subr.mxu0 0.0
  %659 = vmatpush1.msra.mxu0 0.0
  %660 = vmatprep.mubr.f32.mxu0 0.0
  %661 = vmatmul.mubr.f32.gmra.mrb[0].mxu0 %v524
  %v662 = vpop.f32.mrb[0].mxu0
  %v663 = vadd.f32 0.0, %v662
  %v664 = vpop.f32.mrb[0].mxu0
  %665 = vdwg.mxu0
  %666 = vmatprep.subr.mxu0 0.0
  %667 = vmatpush1.msra.mxu0 %v37
  %668 = vmatprep.subr.mxu0 0.0
  %669 = vmatpush1.msra.mxu0 %v38
  %670 = vmatprep.subr.mxu0 0.0
  %671 = vmatpush1.msra.mxu0 %v39
  %672 = vmatprep.subr.mxu0 0.0
  %673 = vmatpush1.msra.mxu0 %v40
  %674 = vmatprep.subr.mxu0 0.0
  %675 = vmatpush1.msra.mxu0 0.0
  %676 = vmatprep.subr.mxu0 0.0
  %677 = vmatpush1.msra.mxu0 0.0
  %678 = vmatprep.subr.mxu0 0.0
  %679 = vmatpush1.msra.mxu0 0.0
  %680 = vmatprep.subr.mxu0 0.0
  %681 = vmatpush1.msra.mxu0 0.0
  %682 = vmatprep.subr.mxu0 0.0
  %683 = vmatpush1.msra.mxu0 0.0
  %684 = vmatprep.subr.mxu0 0.0
  %685 = vmatpush1.msra.mxu0 0.0
  %686 = vmatprep.subr.mxu0 0.0
  %687 = vmatpush1.msra.mxu0 0.0
  %688 = vmatprep.subr.mxu0 0.0
  %689 = vmatpush1.msra.mxu0 0.0
  %690 = vmatprep.subr.mxu0 0.0
  %691 = vmatpush1.msra.mxu0 0.0
  %692 = vmatprep.subr.mxu0 0.0
  %693 = vmatpush1.msra.mxu0 0.0
  %694 = vmatprep.subr.mxu0 0.0
  %695 = vmatpush1.msra.mxu0 0.0
  %696 = vmatprep.subr.mxu0 0.0
  %697 = vmatpush1.msra.mxu0 0.0
  %698 = vmatprep.subr.mxu0 0.0
  %699 = vmatpush1.msra.mxu0 0.0
  %700 = vmatprep.subr.mxu0 0.0
  %701 = vmatpush1.msra.mxu0 0.0
  %702 = vmatprep.subr.mxu0 0.0
  %703 = vmatpush1.msra.mxu0 0.0
  %704 = vmatprep.subr.mxu0 0.0
  %705 = vmatpush1.msra.mxu0 0.0
  %706 = vmatprep.subr.mxu0 0.0
  %707 = vmatpush1.msra.mxu0 0.0
  %708 = vmatprep.subr.mxu0 0.0
  %709 = vmatpush1.msra.mxu0 0.0
  %710 = vmatprep.subr.mxu0 0.0
  %711 = vmatpush1.msra.mxu0 0.0
  %712 = vmatprep.subr.mxu0 0.0
  %713 = vmatpush1.msra.mxu0 0.0
  %714 = vmatprep.subr.mxu0 0.0
  %715 = vmatpush1.msra.mxu0 0.0
  %716 = vmatprep.subr.mxu0 0.0
  %717 = vmatpush1.msra.mxu0 0.0
  %718 = vmatprep.subr.mxu0 0.0
  %719 = vmatpush1.msra.mxu0 0.0
  %720 = vmatprep.subr.mxu0 0.0
  %721 = vmatpush1.msra.mxu0 0.0
  %722 = vmatprep.subr.mxu0 0.0
  %723 = vmatpush1.msra.mxu0 0.0
  %724 = vmatprep.subr.mxu0 0.0
  %725 = vmatpush1.msra.mxu0 0.0
  %726 = vmatprep.subr.mxu0 0.0
  %727 = vmatpush1.msra.mxu0 0.0
  %728 = vmatprep.subr.mxu0 0.0
  %729 = vmatpush1.msra.mxu0 0.0
  %730 = vmatprep.mubr.f32.mxu0 0.0
  %731 = vmatmul.mubr.f32.gmra.mrb[0].mxu0 %v524
  %v732 = vpop.f32.mrb[0].mxu0
  %v733 = vadd.f32 %v41, %v732
  %v734 = vpop.f32.mrb[0].mxu0
  %735 = vdwg.mxu0
  %s736 = scalar_lea.vmem %s0, 4
  %v737 = vld [vmem:[%s736] sm:$0x3]
  %v738 = vadd.f32 %v737, %v593
  %v739 = vxor.u32 %v738, 2147483648
  %v740 = vmul.f32 %v739, 1.442695
  %v741 = vpow.pop %v740
  %v742 = vadd.f32 %v741, 1.0
  %v743 = vrcp.pop %v742
  %v744 = vmul.f32 1.0, %v743
  %s745 = scalar_lea.vmem %s1, 4
  %v746 = vld [vmem:[%s745] sm:$0x3]
  %v747 = vadd.f32 %v746, %v663
  %v748 = vxor.u32 %v747, 2147483648
  %v749 = vmul.f32 %v748, 1.442695
  %v750 = vpow.pop %v749
  %v751 = vadd.f32 %v750, 1.0
  %v752 = vrcp.pop %v751
  %v753 = vmul.f32 1.0, %v752
  %s754 = scalar_lea.vmem %s2, 4
  %v755 = vld [vmem:[%s754] sm:$0x3]
  %v756 = vmul.f32 %v744, %v733
  %v757 = vadd.f32 %v755, %v756
  %v758 = vtanh.pop %v757
  %v759 = vsub.f32 %v520, %v758
  %v760 = vmul.f32 %v753, %v759
  %v761 = vadd.f32 %v758, %v760
  %s762 = scalar_lea.vmem %s8, 4
  %763 = vst.msk [vmem:[%s762] sm:$0x3] %vm280, %v761
  %v765 = vsel %vm43, %v761, 0
  %767 = vmatprep.subr.mxu0 0.0
  %768 = vmatpush1.msra.mxu0 %v29
  %769 = vmatprep.subr.mxu0 0.0
  %770 = vmatpush1.msra.mxu0 %v30
  %771 = vmatprep.subr.mxu0 0.0
  %772 = vmatpush1.msra.mxu0 %v31
  %773 = vmatprep.subr.mxu0 0.0
  %774 = vmatpush1.msra.mxu0 %v32
  %775 = vmatprep.subr.mxu0 0.0
  %776 = vmatpush1.msra.mxu0 0.0
  %777 = vmatprep.subr.mxu0 0.0
  %778 = vmatpush1.msra.mxu0 0.0
  %779 = vmatprep.subr.mxu0 0.0
  %780 = vmatpush1.msra.mxu0 0.0
  %781 = vmatprep.subr.mxu0 0.0
  %782 = vmatpush1.msra.mxu0 0.0
  %783 = vmatprep.subr.mxu0 0.0
  %784 = vmatpush1.msra.mxu0 0.0
  %785 = vmatprep.subr.mxu0 0.0
  %786 = vmatpush1.msra.mxu0 0.0
  %787 = vmatprep.subr.mxu0 0.0
  %788 = vmatpush1.msra.mxu0 0.0
  %789 = vmatprep.subr.mxu0 0.0
  %790 = vmatpush1.msra.mxu0 0.0
  %791 = vmatprep.subr.mxu0 0.0
  %792 = vmatpush1.msra.mxu0 0.0
  %793 = vmatprep.subr.mxu0 0.0
  %794 = vmatpush1.msra.mxu0 0.0
  %795 = vmatprep.subr.mxu0 0.0
  %796 = vmatpush1.msra.mxu0 0.0
  %797 = vmatprep.subr.mxu0 0.0
  %798 = vmatpush1.msra.mxu0 0.0
  %799 = vmatprep.subr.mxu0 0.0
  %800 = vmatpush1.msra.mxu0 0.0
  %801 = vmatprep.subr.mxu0 0.0
  %802 = vmatpush1.msra.mxu0 0.0
  %803 = vmatprep.subr.mxu0 0.0
  %804 = vmatpush1.msra.mxu0 0.0
  %805 = vmatprep.subr.mxu0 0.0
  %806 = vmatpush1.msra.mxu0 0.0
  %807 = vmatprep.subr.mxu0 0.0
  %808 = vmatpush1.msra.mxu0 0.0
  %809 = vmatprep.subr.mxu0 0.0
  %810 = vmatpush1.msra.mxu0 0.0
  %811 = vmatprep.subr.mxu0 0.0
  %812 = vmatpush1.msra.mxu0 0.0
  %813 = vmatprep.subr.mxu0 0.0
  %814 = vmatpush1.msra.mxu0 0.0
  %815 = vmatprep.subr.mxu0 0.0
  %816 = vmatpush1.msra.mxu0 0.0
  %817 = vmatprep.subr.mxu0 0.0
  %818 = vmatpush1.msra.mxu0 0.0
  %819 = vmatprep.subr.mxu0 0.0
  %820 = vmatpush1.msra.mxu0 0.0
  %821 = vmatprep.subr.mxu0 0.0
  %822 = vmatpush1.msra.mxu0 0.0
  %823 = vmatprep.subr.mxu0 0.0
  %824 = vmatpush1.msra.mxu0 0.0
  %825 = vmatprep.subr.mxu0 0.0
  %826 = vmatpush1.msra.mxu0 0.0
  %827 = vmatprep.subr.mxu0 0.0
  %828 = vmatpush1.msra.mxu0 0.0
  %829 = vmatprep.subr.mxu0 0.0
  %830 = vmatpush1.msra.mxu0 0.0
  %831 = vmatprep.mubr.f32.mxu0 0.0
  %832 = vmatmul.mubr.f32.gmra.mrb[0].mxu0 %v765
  %v833 = vpop.f32.mrb[0].mxu0
  %v834 = vadd.f32 0.0, %v833
  %v835 = vpop.f32.mrb[0].mxu0
  %836 = vdwg.mxu0
  %837 = vmatprep.subr.mxu0 0.0
  %838 = vmatpush1.msra.mxu0 %v33
  %839 = vmatprep.subr.mxu0 0.0
  %840 = vmatpush1.msra.mxu0 %v34
  %841 = vmatprep.subr.mxu0 0.0
  %842 = vmatpush1.msra.mxu0 %v35
  %843 = vmatprep.subr.mxu0 0.0
  %844 = vmatpush1.msra.mxu0 %v36
  %845 = vmatprep.subr.mxu0 0.0
  %846 = vmatpush1.msra.mxu0 0.0
  %847 = vmatprep.subr.mxu0 0.0
  %848 = vmatpush1.msra.mxu0 0.0
  %849 = vmatprep.subr.mxu0 0.0
  %850 = vmatpush1.msra.mxu0 0.0
  %851 = vmatprep.subr.mxu0 0.0
  %852 = vmatpush1.msra.mxu0 0.0
  %853 = vmatprep.subr.mxu0 0.0
  %854 = vmatpush1.msra.mxu0 0.0
  %855 = vmatprep.subr.mxu0 0.0
  %856 = vmatpush1.msra.mxu0 0.0
  %857 = vmatprep.subr.mxu0 0.0
  %858 = vmatpush1.msra.mxu0 0.0
  %859 = vmatprep.subr.mxu0 0.0
  %860 = vmatpush1.msra.mxu0 0.0
  %861 = vmatprep.subr.mxu0 0.0
  %862 = vmatpush1.msra.mxu0 0.0
  %863 = vmatprep.subr.mxu0 0.0
  %864 = vmatpush1.msra.mxu0 0.0
  %865 = vmatprep.subr.mxu0 0.0
  %866 = vmatpush1.msra.mxu0 0.0
  %867 = vmatprep.subr.mxu0 0.0
  %868 = vmatpush1.msra.mxu0 0.0
  %869 = vmatprep.subr.mxu0 0.0
  %870 = vmatpush1.msra.mxu0 0.0
  %871 = vmatprep.subr.mxu0 0.0
  %872 = vmatpush1.msra.mxu0 0.0
  %873 = vmatprep.subr.mxu0 0.0
  %874 = vmatpush1.msra.mxu0 0.0
  %875 = vmatprep.subr.mxu0 0.0
  %876 = vmatpush1.msra.mxu0 0.0
  %877 = vmatprep.subr.mxu0 0.0
  %878 = vmatpush1.msra.mxu0 0.0
  %879 = vmatprep.subr.mxu0 0.0
  %880 = vmatpush1.msra.mxu0 0.0
  %881 = vmatprep.subr.mxu0 0.0
  %882 = vmatpush1.msra.mxu0 0.0
  %883 = vmatprep.subr.mxu0 0.0
  %884 = vmatpush1.msra.mxu0 0.0
  %885 = vmatprep.subr.mxu0 0.0
  %886 = vmatpush1.msra.mxu0 0.0
  %887 = vmatprep.subr.mxu0 0.0
  %888 = vmatpush1.msra.mxu0 0.0
  %889 = vmatprep.subr.mxu0 0.0
  %890 = vmatpush1.msra.mxu0 0.0
  %891 = vmatprep.subr.mxu0 0.0
  %892 = vmatpush1.msra.mxu0 0.0
  %893 = vmatprep.subr.mxu0 0.0
  %894 = vmatpush1.msra.mxu0 0.0
  %895 = vmatprep.subr.mxu0 0.0
  %896 = vmatpush1.msra.mxu0 0.0
  %897 = vmatprep.subr.mxu0 0.0
  %898 = vmatpush1.msra.mxu0 0.0
  %899 = vmatprep.subr.mxu0 0.0
  %900 = vmatpush1.msra.mxu0 0.0
  %901 = vmatprep.mubr.f32.mxu0 0.0
  %902 = vmatmul.mubr.f32.gmra.mrb[0].mxu0 %v765
  %v903 = vpop.f32.mrb[0].mxu0
  %v904 = vadd.f32 0.0, %v903
  %v905 = vpop.f32.mrb[0].mxu0
  %906 = vdwg.mxu0
  %907 = vmatprep.subr.mxu0 0.0
  %908 = vmatpush1.msra.mxu0 %v37
  %909 = vmatprep.subr.mxu0 0.0
  %910 = vmatpush1.msra.mxu0 %v38
  %911 = vmatprep.subr.mxu0 0.0
  %912 = vmatpush1.msra.mxu0 %v39
  %913 = vmatprep.subr.mxu0 0.0
  %914 = vmatpush1.msra.mxu0 %v40
  %915 = vmatprep.subr.mxu0 0.0
  %916 = vmatpush1.msra.mxu0 0.0
  %917 = vmatprep.subr.mxu0 0.0
  %918 = vmatpush1.msra.mxu0 0.0
  %919 = vmatprep.subr.mxu0 0.0
  %920 = vmatpush1.msra.mxu0 0.0
  %921 = vmatprep.subr.mxu0 0.0
  %922 = vmatpush1.msra.mxu0 0.0
  %923 = vmatprep.subr.mxu0 0.0
  %924 = vmatpush1.msra.mxu0 0.0
  %925 = vmatprep.subr.mxu0 0.0
  %926 = vmatpush1.msra.mxu0 0.0
  %927 = vmatprep.subr.mxu0 0.0
  %928 = vmatpush1.msra.mxu0 0.0
  %929 = vmatprep.subr.mxu0 0.0
  %930 = vmatpush1.msra.mxu0 0.0
  %931 = vmatprep.subr.mxu0 0.0
  %932 = vmatpush1.msra.mxu0 0.0
  %933 = vmatprep.subr.mxu0 0.0
  %934 = vmatpush1.msra.mxu0 0.0
  %935 = vmatprep.subr.mxu0 0.0
  %936 = vmatpush1.msra.mxu0 0.0
  %937 = vmatprep.subr.mxu0 0.0
  %938 = vmatpush1.msra.mxu0 0.0
  %939 = vmatprep.subr.mxu0 0.0
  %940 = vmatpush1.msra.mxu0 0.0
  %941 = vmatprep.subr.mxu0 0.0
  %942 = vmatpush1.msra.mxu0 0.0
  %943 = vmatprep.subr.mxu0 0.0
  %944 = vmatpush1.msra.mxu0 0.0
  %945 = vmatprep.subr.mxu0 0.0
  %946 = vmatpush1.msra.mxu0 0.0
  %947 = vmatprep.subr.mxu0 0.0
  %948 = vmatpush1.msra.mxu0 0.0
  %949 = vmatprep.subr.mxu0 0.0
  %950 = vmatpush1.msra.mxu0 0.0
  %951 = vmatprep.subr.mxu0 0.0
  %952 = vmatpush1.msra.mxu0 0.0
  %953 = vmatprep.subr.mxu0 0.0
  %954 = vmatpush1.msra.mxu0 0.0
  %955 = vmatprep.subr.mxu0 0.0
  %956 = vmatpush1.msra.mxu0 0.0
  %957 = vmatprep.subr.mxu0 0.0
  %958 = vmatpush1.msra.mxu0 0.0
  %959 = vmatprep.subr.mxu0 0.0
  %960 = vmatpush1.msra.mxu0 0.0
  %961 = vmatprep.subr.mxu0 0.0
  %962 = vmatpush1.msra.mxu0 0.0
  %963 = vmatprep.subr.mxu0 0.0
  %964 = vmatpush1.msra.mxu0 0.0
  %965 = vmatprep.subr.mxu0 0.0
  %966 = vmatpush1.msra.mxu0 0.0
  %967 = vmatprep.subr.mxu0 0.0
  %968 = vmatpush1.msra.mxu0 0.0
  %969 = vmatprep.subr.mxu0 0.0
  %970 = vmatpush1.msra.mxu0 0.0
  %971 = vmatprep.mubr.f32.mxu0 0.0
  %972 = vmatmul.mubr.f32.gmra.mrb[0].mxu0 %v765
  %v973 = vpop.f32.mrb[0].mxu0
  %v974 = vadd.f32 %v41, %v973
  %v975 = vpop.f32.mrb[0].mxu0
  %976 = vdwg.mxu0
  %s977 = scalar_lea.vmem %s0, 6
  %v978 = vld [vmem:[%s977] sm:$0x3]
  %v979 = vadd.f32 %v978, %v834
  %v980 = vxor.u32 %v979, 2147483648
  %v981 = vmul.f32 %v980, 1.442695
  %v982 = vpow.pop %v981
  %v983 = vadd.f32 %v982, 1.0
  %v984 = vrcp.pop %v983
  %v985 = vmul.f32 1.0, %v984
  %s986 = scalar_lea.vmem %s1, 6
  %v987 = vld [vmem:[%s986] sm:$0x3]
  %v988 = vadd.f32 %v987, %v904
  %v989 = vxor.u32 %v988, 2147483648
  %v990 = vmul.f32 %v989, 1.442695
  %v991 = vpow.pop %v990
  %v992 = vadd.f32 %v991, 1.0
  %v993 = vrcp.pop %v992
  %v994 = vmul.f32 1.0, %v993
  %s995 = scalar_lea.vmem %s2, 6
  %v996 = vld [vmem:[%s995] sm:$0x3]
  %v997 = vmul.f32 %v985, %v974
  %v998 = vadd.f32 %v996, %v997
  %v999 = vtanh.pop %v998
  %v1000 = vsub.f32 %v761, %v999
  %v1001 = vmul.f32 %v994, %v1000
  %v1002 = vadd.f32 %v999, %v1001
  %s1003 = scalar_lea.vmem %s8, 6
  %1004 = vst.msk [vmem:[%s1003] sm:$0x3] %vm280, %v1002
  %v1006 = vsel %vm43, %v1002, 0
  %1008 = vmatprep.subr.mxu0 0.0
  %1009 = vmatpush1.msra.mxu0 %v29
  %1010 = vmatprep.subr.mxu0 0.0
  %1011 = vmatpush1.msra.mxu0 %v30
  %1012 = vmatprep.subr.mxu0 0.0
  %1013 = vmatpush1.msra.mxu0 %v31
  %1014 = vmatprep.subr.mxu0 0.0
  %1015 = vmatpush1.msra.mxu0 %v32
  %1016 = vmatprep.subr.mxu0 0.0
  %1017 = vmatpush1.msra.mxu0 0.0
  %1018 = vmatprep.subr.mxu0 0.0
  %1019 = vmatpush1.msra.mxu0 0.0
  %1020 = vmatprep.subr.mxu0 0.0
  %1021 = vmatpush1.msra.mxu0 0.0
  %1022 = vmatprep.subr.mxu0 0.0
  %1023 = vmatpush1.msra.mxu0 0.0
  %1024 = vmatprep.subr.mxu0 0.0
  %1025 = vmatpush1.msra.mxu0 0.0
  %1026 = vmatprep.subr.mxu0 0.0
  %1027 = vmatpush1.msra.mxu0 0.0
  %1028 = vmatprep.subr.mxu0 0.0
  %1029 = vmatpush1.msra.mxu0 0.0
  %1030 = vmatprep.subr.mxu0 0.0
  %1031 = vmatpush1.msra.mxu0 0.0
  %1032 = vmatprep.subr.mxu0 0.0
  %1033 = vmatpush1.msra.mxu0 0.0
  %1034 = vmatprep.subr.mxu0 0.0
  %1035 = vmatpush1.msra.mxu0 0.0
  %1036 = vmatprep.subr.mxu0 0.0
  %1037 = vmatpush1.msra.mxu0 0.0
  %1038 = vmatprep.subr.mxu0 0.0
  %1039 = vmatpush1.msra.mxu0 0.0
  %1040 = vmatprep.subr.mxu0 0.0
  %1041 = vmatpush1.msra.mxu0 0.0
  %1042 = vmatprep.subr.mxu0 0.0
  %1043 = vmatpush1.msra.mxu0 0.0
  %1044 = vmatprep.subr.mxu0 0.0
  %1045 = vmatpush1.msra.mxu0 0.0
  %1046 = vmatprep.subr.mxu0 0.0
  %1047 = vmatpush1.msra.mxu0 0.0
  %1048 = vmatprep.subr.mxu0 0.0
  %1049 = vmatpush1.msra.mxu0 0.0
  %1050 = vmatprep.subr.mxu0 0.0
  %1051 = vmatpush1.msra.mxu0 0.0
  %1052 = vmatprep.subr.mxu0 0.0
  %1053 = vmatpush1.msra.mxu0 0.0
  %1054 = vmatprep.subr.mxu0 0.0
  %1055 = vmatpush1.msra.mxu0 0.0
  %1056 = vmatprep.subr.mxu0 0.0
  %1057 = vmatpush1.msra.mxu0 0.0
  %1058 = vmatprep.subr.mxu0 0.0
  %1059 = vmatpush1.msra.mxu0 0.0
  %1060 = vmatprep.subr.mxu0 0.0
  %1061 = vmatpush1.msra.mxu0 0.0
  %1062 = vmatprep.subr.mxu0 0.0
  %1063 = vmatpush1.msra.mxu0 0.0
  %1064 = vmatprep.subr.mxu0 0.0
  %1065 = vmatpush1.msra.mxu0 0.0
  %1066 = vmatprep.subr.mxu0 0.0
  %1067 = vmatpush1.msra.mxu0 0.0
  %1068 = vmatprep.subr.mxu0 0.0
  %1069 = vmatpush1.msra.mxu0 0.0
  %1070 = vmatprep.subr.mxu0 0.0
  %1071 = vmatpush1.msra.mxu0 0.0
  %1072 = vmatprep.mubr.f32.mxu0 0.0
  %1073 = vmatmul.mubr.f32.gmra.mrb[0].mxu0 %v1006
  %v1074 = vpop.f32.mrb[0].mxu0
  %v1075 = vadd.f32 0.0, %v1074
  %v1076 = vpop.f32.mrb[0].mxu0
  %1077 = vdwg.mxu0
  %1078 = vmatprep.subr.mxu0 0.0
  %1079 = vmatpush1.msra.mxu0 %v33
  %1080 = vmatprep.subr.mxu0 0.0
  %1081 = vmatpush1.msra.mxu0 %v34
  %1082 = vmatprep.subr.mxu0 0.0
  %1083 = vmatpush1.msra.mxu0 %v35
  %1084 = vmatprep.subr.mxu0 0.0
  %1085 = vmatpush1.msra.mxu0 %v36
  %1086 = vmatprep.subr.mxu0 0.0
  %1087 = vmatpush1.msra.mxu0 0.0
  %1088 = vmatprep.subr.mxu0 0.0
  %1089 = vmatpush1.msra.mxu0 0.0
  %1090 = vmatprep.subr.mxu0 0.0
  %1091 = vmatpush1.msra.mxu0 0.0
  %1092 = vmatprep.subr.mxu0 0.0
  %1093 = vmatpush1.msra.mxu0 0.0
  %1094 = vmatprep.subr.mxu0 0.0
  %1095 = vmatpush1.msra.mxu0 0.0
  %1096 = vmatprep.subr.mxu0 0.0
  %1097 = vmatpush1.msra.mxu0 0.0
  %1098 = vmatprep.subr.mxu0 0.0
  %1099 = vmatpush1.msra.mxu0 0.0
  %1100 = vmatprep.subr.mxu0 0.0
  %1101 = vmatpush1.msra.mxu0 0.0
  %1102 = vmatprep.subr.mxu0 0.0
  %1103 = vmatpush1.msra.mxu0 0.0
  %1104 = vmatprep.subr.mxu0 0.0
  %1105 = vmatpush1.msra.mxu0 0.0
  %1106 = vmatprep.subr.mxu0 0.0
  %1107 = vmatpush1.msra.mxu0 0.0
  %1108 = vmatprep.subr.mxu0 0.0
  %1109 = vmatpush1.msra.mxu0 0.0
  %1110 = vmatprep.subr.mxu0 0.0
  %1111 = vmatpush1.msra.mxu0 0.0
  %1112 = vmatprep.subr.mxu0 0.0
  %1113 = vmatpush1.msra.mxu0 0.0
  %1114 = vmatprep.subr.mxu0 0.0
  %1115 = vmatpush1.msra.mxu0 0.0
  %1116 = vmatprep.subr.mxu0 0.0
  %1117 = vmatpush1.msra.mxu0 0.0
  %1118 = vmatprep.subr.mxu0 0.0
  %1119 = vmatpush1.msra.mxu0 0.0
  %1120 = vmatprep.subr.mxu0 0.0
  %1121 = vmatpush1.msra.mxu0 0.0
  %1122 = vmatprep.subr.mxu0 0.0
  %1123 = vmatpush1.msra.mxu0 0.0
  %1124 = vmatprep.subr.mxu0 0.0
  %1125 = vmatpush1.msra.mxu0 0.0
  %1126 = vmatprep.subr.mxu0 0.0
  %1127 = vmatpush1.msra.mxu0 0.0
  %1128 = vmatprep.subr.mxu0 0.0
  %1129 = vmatpush1.msra.mxu0 0.0
  %1130 = vmatprep.subr.mxu0 0.0
  %1131 = vmatpush1.msra.mxu0 0.0
  %1132 = vmatprep.subr.mxu0 0.0
  %1133 = vmatpush1.msra.mxu0 0.0
  %1134 = vmatprep.subr.mxu0 0.0
  %1135 = vmatpush1.msra.mxu0 0.0
  %1136 = vmatprep.subr.mxu0 0.0
  %1137 = vmatpush1.msra.mxu0 0.0
  %1138 = vmatprep.subr.mxu0 0.0
  %1139 = vmatpush1.msra.mxu0 0.0
  %1140 = vmatprep.subr.mxu0 0.0
  %1141 = vmatpush1.msra.mxu0 0.0
  %1142 = vmatprep.mubr.f32.mxu0 0.0
  %1143 = vmatmul.mubr.f32.gmra.mrb[0].mxu0 %v1006
  %v1144 = vpop.f32.mrb[0].mxu0
  %v1145 = vadd.f32 0.0, %v1144
  %v1146 = vpop.f32.mrb[0].mxu0
  %1147 = vdwg.mxu0
  %1148 = vmatprep.subr.mxu0 0.0
  %1149 = vmatpush1.msra.mxu0 %v37
  %1150 = vmatprep.subr.mxu0 0.0
  %1151 = vmatpush1.msra.mxu0 %v38
  %1152 = vmatprep.subr.mxu0 0.0
  %1153 = vmatpush1.msra.mxu0 %v39
  %1154 = vmatprep.subr.mxu0 0.0
  %1155 = vmatpush1.msra.mxu0 %v40
  %1156 = vmatprep.subr.mxu0 0.0
  %1157 = vmatpush1.msra.mxu0 0.0
  %1158 = vmatprep.subr.mxu0 0.0
  %1159 = vmatpush1.msra.mxu0 0.0
  %1160 = vmatprep.subr.mxu0 0.0
  %1161 = vmatpush1.msra.mxu0 0.0
  %1162 = vmatprep.subr.mxu0 0.0
  %1163 = vmatpush1.msra.mxu0 0.0
  %1164 = vmatprep.subr.mxu0 0.0
  %1165 = vmatpush1.msra.mxu0 0.0
  %1166 = vmatprep.subr.mxu0 0.0
  %1167 = vmatpush1.msra.mxu0 0.0
  %1168 = vmatprep.subr.mxu0 0.0
  %1169 = vmatpush1.msra.mxu0 0.0
  %1170 = vmatprep.subr.mxu0 0.0
  %1171 = vmatpush1.msra.mxu0 0.0
  %1172 = vmatprep.subr.mxu0 0.0
  %1173 = vmatpush1.msra.mxu0 0.0
  %1174 = vmatprep.subr.mxu0 0.0
  %1175 = vmatpush1.msra.mxu0 0.0
  %1176 = vmatprep.subr.mxu0 0.0
  %1177 = vmatpush1.msra.mxu0 0.0
  %1178 = vmatprep.subr.mxu0 0.0
  %1179 = vmatpush1.msra.mxu0 0.0
  %1180 = vmatprep.subr.mxu0 0.0
  %1181 = vmatpush1.msra.mxu0 0.0
  %1182 = vmatprep.subr.mxu0 0.0
  %1183 = vmatpush1.msra.mxu0 0.0
  %1184 = vmatprep.subr.mxu0 0.0
  %1185 = vmatpush1.msra.mxu0 0.0
  %1186 = vmatprep.subr.mxu0 0.0
  %1187 = vmatpush1.msra.mxu0 0.0
  %1188 = vmatprep.subr.mxu0 0.0
  %1189 = vmatpush1.msra.mxu0 0.0
  %1190 = vmatprep.subr.mxu0 0.0
  %1191 = vmatpush1.msra.mxu0 0.0
  %1192 = vmatprep.subr.mxu0 0.0
  %1193 = vmatpush1.msra.mxu0 0.0
  %1194 = vmatprep.subr.mxu0 0.0
  %1195 = vmatpush1.msra.mxu0 0.0
  %1196 = vmatprep.subr.mxu0 0.0
  %1197 = vmatpush1.msra.mxu0 0.0
  %1198 = vmatprep.subr.mxu0 0.0
  %1199 = vmatpush1.msra.mxu0 0.0
  %1200 = vmatprep.subr.mxu0 0.0
  %1201 = vmatpush1.msra.mxu0 0.0
  %1202 = vmatprep.subr.mxu0 0.0
  %1203 = vmatpush1.msra.mxu0 0.0
  %1204 = vmatprep.subr.mxu0 0.0
  %1205 = vmatpush1.msra.mxu0 0.0
  %1206 = vmatprep.subr.mxu0 0.0
  %1207 = vmatpush1.msra.mxu0 0.0
  %1208 = vmatprep.subr.mxu0 0.0
  %1209 = vmatpush1.msra.mxu0 0.0
  %1210 = vmatprep.subr.mxu0 0.0
  %1211 = vmatpush1.msra.mxu0 0.0
  %1212 = vmatprep.mubr.f32.mxu0 0.0
  %1213 = vmatmul.mubr.f32.gmra.mrb[0].mxu0 %v1006
  %v1214 = vpop.f32.mrb[0].mxu0
  %v1215 = vadd.f32 %v41, %v1214
  %v1216 = vpop.f32.mrb[0].mxu0
  %1217 = vdwg.mxu0
  %s1218 = scalar_lea.vmem %s0, 8
  %v1219 = vld [vmem:[%s1218] sm:$0x3]
  %v1220 = vadd.f32 %v1219, %v1075
  %v1221 = vxor.u32 %v1220, 2147483648
  %v1222 = vmul.f32 %v1221, 1.442695
  %v1223 = vpow.pop %v1222
  %v1224 = vadd.f32 %v1223, 1.0
  %v1225 = vrcp.pop %v1224
  %v1226 = vmul.f32 1.0, %v1225
  %s1227 = scalar_lea.vmem %s1, 8
  %v1228 = vld [vmem:[%s1227] sm:$0x3]
  %v1229 = vadd.f32 %v1228, %v1145
  %v1230 = vxor.u32 %v1229, 2147483648
  %v1231 = vmul.f32 %v1230, 1.442695
  %v1232 = vpow.pop %v1231
  %v1233 = vadd.f32 %v1232, 1.0
  %v1234 = vrcp.pop %v1233
  %v1235 = vmul.f32 1.0, %v1234
  %s1236 = scalar_lea.vmem %s2, 8
  %v1237 = vld [vmem:[%s1236] sm:$0x3]
  %v1238 = vmul.f32 %v1226, %v1215
  %v1239 = vadd.f32 %v1237, %v1238
  %v1240 = vtanh.pop %v1239
  %v1241 = vsub.f32 %v1002, %v1240
  %v1242 = vmul.f32 %v1235, %v1241
  %v1243 = vadd.f32 %v1240, %v1242
  %s1244 = scalar_lea.vmem %s8, 8
  %1245 = vst.msk [vmem:[%s1244] sm:$0x3] %vm280, %v1243
  %v1247 = vsel %vm43, %v1243, 0
  %1249 = vmatprep.subr.mxu0 0.0
  %1250 = vmatpush1.msra.mxu0 %v29
  %1251 = vmatprep.subr.mxu0 0.0
  %1252 = vmatpush1.msra.mxu0 %v30
  %1253 = vmatprep.subr.mxu0 0.0
  %1254 = vmatpush1.msra.mxu0 %v31
  %1255 = vmatprep.subr.mxu0 0.0
  %1256 = vmatpush1.msra.mxu0 %v32
  %1257 = vmatprep.subr.mxu0 0.0
  %1258 = vmatpush1.msra.mxu0 0.0
  %1259 = vmatprep.subr.mxu0 0.0
  %1260 = vmatpush1.msra.mxu0 0.0
  %1261 = vmatprep.subr.mxu0 0.0
  %1262 = vmatpush1.msra.mxu0 0.0
  %1263 = vmatprep.subr.mxu0 0.0
  %1264 = vmatpush1.msra.mxu0 0.0
  %1265 = vmatprep.subr.mxu0 0.0
  %1266 = vmatpush1.msra.mxu0 0.0
  %1267 = vmatprep.subr.mxu0 0.0
  %1268 = vmatpush1.msra.mxu0 0.0
  %1269 = vmatprep.subr.mxu0 0.0
  %1270 = vmatpush1.msra.mxu0 0.0
  %1271 = vmatprep.subr.mxu0 0.0
  %1272 = vmatpush1.msra.mxu0 0.0
  %1273 = vmatprep.subr.mxu0 0.0
  %1274 = vmatpush1.msra.mxu0 0.0
  %1275 = vmatprep.subr.mxu0 0.0
  %1276 = vmatpush1.msra.mxu0 0.0
  %1277 = vmatprep.subr.mxu0 0.0
  %1278 = vmatpush1.msra.mxu0 0.0
  %1279 = vmatprep.subr.mxu0 0.0
  %1280 = vmatpush1.msra.mxu0 0.0
  %1281 = vmatprep.subr.mxu0 0.0
  %1282 = vmatpush1.msra.mxu0 0.0
  %1283 = vmatprep.subr.mxu0 0.0
  %1284 = vmatpush1.msra.mxu0 0.0
  %1285 = vmatprep.subr.mxu0 0.0
  %1286 = vmatpush1.msra.mxu0 0.0
  %1287 = vmatprep.subr.mxu0 0.0
  %1288 = vmatpush1.msra.mxu0 0.0
  %1289 = vmatprep.subr.mxu0 0.0
  %1290 = vmatpush1.msra.mxu0 0.0
  %1291 = vmatprep.subr.mxu0 0.0
  %1292 = vmatpush1.msra.mxu0 0.0
  %1293 = vmatprep.subr.mxu0 0.0
  %1294 = vmatpush1.msra.mxu0 0.0
  %1295 = vmatprep.subr.mxu0 0.0
  %1296 = vmatpush1.msra.mxu0 0.0
  %1297 = vmatprep.subr.mxu0 0.0
  %1298 = vmatpush1.msra.mxu0 0.0
  %1299 = vmatprep.subr.mxu0 0.0
  %1300 = vmatpush1.msra.mxu0 0.0
  %1301 = vmatprep.subr.mxu0 0.0
  %1302 = vmatpush1.msra.mxu0 0.0
  %1303 = vmatprep.subr.mxu0 0.0
  %1304 = vmatpush1.msra.mxu0 0.0
  %1305 = vmatprep.subr.mxu0 0.0
  %1306 = vmatpush1.msra.mxu0 0.0
  %1307 = vmatprep.subr.mxu0 0.0
  %1308 = vmatpush1.msra.mxu0 0.0
  %1309 = vmatprep.subr.mxu0 0.0
  %1310 = vmatpush1.msra.mxu0 0.0
  %1311 = vmatprep.subr.mxu0 0.0
  %1312 = vmatpush1.msra.mxu0 0.0
  %1313 = vmatprep.mubr.f32.mxu0 0.0
  %1314 = vmatmul.mubr.f32.gmra.mrb[0].mxu0 %v1247
  %v1315 = vpop.f32.mrb[0].mxu0
  %v1316 = vadd.f32 0.0, %v1315
  %v1317 = vpop.f32.mrb[0].mxu0
  %1318 = vdwg.mxu0
  %1319 = vmatprep.subr.mxu0 0.0
  %1320 = vmatpush1.msra.mxu0 %v33
  %1321 = vmatprep.subr.mxu0 0.0
  %1322 = vmatpush1.msra.mxu0 %v34
  %1323 = vmatprep.subr.mxu0 0.0
  %1324 = vmatpush1.msra.mxu0 %v35
  %1325 = vmatprep.subr.mxu0 0.0
  %1326 = vmatpush1.msra.mxu0 %v36
  %1327 = vmatprep.subr.mxu0 0.0
  %1328 = vmatpush1.msra.mxu0 0.0
  %1329 = vmatprep.subr.mxu0 0.0
  %1330 = vmatpush1.msra.mxu0 0.0
  %1331 = vmatprep.subr.mxu0 0.0
  %1332 = vmatpush1.msra.mxu0 0.0
  %1333 = vmatprep.subr.mxu0 0.0
  %1334 = vmatpush1.msra.mxu0 0.0
  %1335 = vmatprep.subr.mxu0 0.0
  %1336 = vmatpush1.msra.mxu0 0.0
  %1337 = vmatprep.subr.mxu0 0.0
  %1338 = vmatpush1.msra.mxu0 0.0
  %1339 = vmatprep.subr.mxu0 0.0
  %1340 = vmatpush1.msra.mxu0 0.0
  %1341 = vmatprep.subr.mxu0 0.0
  %1342 = vmatpush1.msra.mxu0 0.0
  %1343 = vmatprep.subr.mxu0 0.0
  %1344 = vmatpush1.msra.mxu0 0.0
  %1345 = vmatprep.subr.mxu0 0.0
  %1346 = vmatpush1.msra.mxu0 0.0
  %1347 = vmatprep.subr.mxu0 0.0
  %1348 = vmatpush1.msra.mxu0 0.0
  %1349 = vmatprep.subr.mxu0 0.0
  %1350 = vmatpush1.msra.mxu0 0.0
  %1351 = vmatprep.subr.mxu0 0.0
  %1352 = vmatpush1.msra.mxu0 0.0
  %1353 = vmatprep.subr.mxu0 0.0
  %1354 = vmatpush1.msra.mxu0 0.0
  %1355 = vmatprep.subr.mxu0 0.0
  %1356 = vmatpush1.msra.mxu0 0.0
  %1357 = vmatprep.subr.mxu0 0.0
  %1358 = vmatpush1.msra.mxu0 0.0
  %1359 = vmatprep.subr.mxu0 0.0
  %1360 = vmatpush1.msra.mxu0 0.0
  %1361 = vmatprep.subr.mxu0 0.0
  %1362 = vmatpush1.msra.mxu0 0.0
  %1363 = vmatprep.subr.mxu0 0.0
  %1364 = vmatpush1.msra.mxu0 0.0
  %1365 = vmatprep.subr.mxu0 0.0
  %1366 = vmatpush1.msra.mxu0 0.0
  %1367 = vmatprep.subr.mxu0 0.0
  %1368 = vmatpush1.msra.mxu0 0.0
  %1369 = vmatprep.subr.mxu0 0.0
  %1370 = vmatpush1.msra.mxu0 0.0
  %1371 = vmatprep.subr.mxu0 0.0
  %1372 = vmatpush1.msra.mxu0 0.0
  %1373 = vmatprep.subr.mxu0 0.0
  %1374 = vmatpush1.msra.mxu0 0.0
  %1375 = vmatprep.subr.mxu0 0.0
  %1376 = vmatpush1.msra.mxu0 0.0
  %1377 = vmatprep.subr.mxu0 0.0
  %1378 = vmatpush1.msra.mxu0 0.0
  %1379 = vmatprep.subr.mxu0 0.0
  %1380 = vmatpush1.msra.mxu0 0.0
  %1381 = vmatprep.subr.mxu0 0.0
  %1382 = vmatpush1.msra.mxu0 0.0
  %1383 = vmatprep.mubr.f32.mxu0 0.0
  %1384 = vmatmul.mubr.f32.gmra.mrb[0].mxu0 %v1247
  %v1385 = vpop.f32.mrb[0].mxu0
  %v1386 = vadd.f32 0.0, %v1385
  %v1387 = vpop.f32.mrb[0].mxu0
  %1388 = vdwg.mxu0
  %1389 = vmatprep.subr.mxu0 0.0
  %1390 = vmatpush1.msra.mxu0 %v37
  %1391 = vmatprep.subr.mxu0 0.0
  %1392 = vmatpush1.msra.mxu0 %v38
  %1393 = vmatprep.subr.mxu0 0.0
  %1394 = vmatpush1.msra.mxu0 %v39
  %1395 = vmatprep.subr.mxu0 0.0
  %1396 = vmatpush1.msra.mxu0 %v40
  %1397 = vmatprep.subr.mxu0 0.0
  %1398 = vmatpush1.msra.mxu0 0.0
  %1399 = vmatprep.subr.mxu0 0.0
  %1400 = vmatpush1.msra.mxu0 0.0
  %1401 = vmatprep.subr.mxu0 0.0
  %1402 = vmatpush1.msra.mxu0 0.0
  %1403 = vmatprep.subr.mxu0 0.0
  %1404 = vmatpush1.msra.mxu0 0.0
  %1405 = vmatprep.subr.mxu0 0.0
  %1406 = vmatpush1.msra.mxu0 0.0
  %1407 = vmatprep.subr.mxu0 0.0
  %1408 = vmatpush1.msra.mxu0 0.0
  %1409 = vmatprep.subr.mxu0 0.0
  %1410 = vmatpush1.msra.mxu0 0.0
  %1411 = vmatprep.subr.mxu0 0.0
  %1412 = vmatpush1.msra.mxu0 0.0
  %1413 = vmatprep.subr.mxu0 0.0
  %1414 = vmatpush1.msra.mxu0 0.0
  %1415 = vmatprep.subr.mxu0 0.0
  %1416 = vmatpush1.msra.mxu0 0.0
  %1417 = vmatprep.subr.mxu0 0.0
  %1418 = vmatpush1.msra.mxu0 0.0
  %1419 = vmatprep.subr.mxu0 0.0
  %1420 = vmatpush1.msra.mxu0 0.0
  %1421 = vmatprep.subr.mxu0 0.0
  %1422 = vmatpush1.msra.mxu0 0.0
  %1423 = vmatprep.subr.mxu0 0.0
  %1424 = vmatpush1.msra.mxu0 0.0
  %1425 = vmatprep.subr.mxu0 0.0
  %1426 = vmatpush1.msra.mxu0 0.0
  %1427 = vmatprep.subr.mxu0 0.0
  %1428 = vmatpush1.msra.mxu0 0.0
  %1429 = vmatprep.subr.mxu0 0.0
  %1430 = vmatpush1.msra.mxu0 0.0
  %1431 = vmatprep.subr.mxu0 0.0
  %1432 = vmatpush1.msra.mxu0 0.0
  %1433 = vmatprep.subr.mxu0 0.0
  %1434 = vmatpush1.msra.mxu0 0.0
  %1435 = vmatprep.subr.mxu0 0.0
  %1436 = vmatpush1.msra.mxu0 0.0
  %1437 = vmatprep.subr.mxu0 0.0
  %1438 = vmatpush1.msra.mxu0 0.0
  %1439 = vmatprep.subr.mxu0 0.0
  %1440 = vmatpush1.msra.mxu0 0.0
  %1441 = vmatprep.subr.mxu0 0.0
  %1442 = vmatpush1.msra.mxu0 0.0
  %1443 = vmatprep.subr.mxu0 0.0
  %1444 = vmatpush1.msra.mxu0 0.0
  %1445 = vmatprep.subr.mxu0 0.0
  %1446 = vmatpush1.msra.mxu0 0.0
  %1447 = vmatprep.subr.mxu0 0.0
  %1448 = vmatpush1.msra.mxu0 0.0
  %1449 = vmatprep.subr.mxu0 0.0
  %1450 = vmatpush1.msra.mxu0 0.0
  %1451 = vmatprep.subr.mxu0 0.0
  %1452 = vmatpush1.msra.mxu0 0.0
  %1453 = vmatprep.mubr.f32.mxu0 0.0
  %1454 = vmatmul.mubr.f32.gmra.mrb[0].mxu0 %v1247
  %v1455 = vpop.f32.mrb[0].mxu0
  %v1456 = vadd.f32 %v41, %v1455
  %v1457 = vpop.f32.mrb[0].mxu0
  %1458 = vdwg.mxu0
  %s1459 = scalar_lea.vmem %s0, 10
  %v1460 = vld [vmem:[%s1459] sm:$0x3]
  %v1461 = vadd.f32 %v1460, %v1316
  %v1462 = vxor.u32 %v1461, 2147483648
  %v1463 = vmul.f32 %v1462, 1.442695
  %v1464 = vpow.pop %v1463
  %v1465 = vadd.f32 %v1464, 1.0
  %v1466 = vrcp.pop %v1465
  %v1467 = vmul.f32 1.0, %v1466
  %s1468 = scalar_lea.vmem %s1, 10
  %v1469 = vld [vmem:[%s1468] sm:$0x3]
  %v1470 = vadd.f32 %v1469, %v1386
  %v1471 = vxor.u32 %v1470, 2147483648
  %v1472 = vmul.f32 %v1471, 1.442695
  %v1473 = vpow.pop %v1472
  %v1474 = vadd.f32 %v1473, 1.0
  %v1475 = vrcp.pop %v1474
  %v1476 = vmul.f32 1.0, %v1475
  %s1477 = scalar_lea.vmem %s2, 10
  %v1478 = vld [vmem:[%s1477] sm:$0x3]
  %v1479 = vmul.f32 %v1467, %v1456
  %v1480 = vadd.f32 %v1478, %v1479
  %v1481 = vtanh.pop %v1480
  %v1482 = vsub.f32 %v1243, %v1481
  %v1483 = vmul.f32 %v1476, %v1482
  %v1484 = vadd.f32 %v1481, %v1483
  %s1485 = scalar_lea.vmem %s8, 10
  %1486 = vst.msk [vmem:[%s1485] sm:$0x3] %vm280, %v1484
  %v1488 = vsel %vm43, %v1484, 0
  %1490 = vmatprep.subr.mxu0 0.0
  %1491 = vmatpush1.msra.mxu0 %v29
  %1492 = vmatprep.subr.mxu0 0.0
  %1493 = vmatpush1.msra.mxu0 %v30
  %1494 = vmatprep.subr.mxu0 0.0
  %1495 = vmatpush1.msra.mxu0 %v31
  %1496 = vmatprep.subr.mxu0 0.0
  %1497 = vmatpush1.msra.mxu0 %v32
  %1498 = vmatprep.subr.mxu0 0.0
  %1499 = vmatpush1.msra.mxu0 0.0
  %1500 = vmatprep.subr.mxu0 0.0
  %1501 = vmatpush1.msra.mxu0 0.0
  %1502 = vmatprep.subr.mxu0 0.0
  %1503 = vmatpush1.msra.mxu0 0.0
  %1504 = vmatprep.subr.mxu0 0.0
  %1505 = vmatpush1.msra.mxu0 0.0
  %1506 = vmatprep.subr.mxu0 0.0
  %1507 = vmatpush1.msra.mxu0 0.0
  %1508 = vmatprep.subr.mxu0 0.0
  %1509 = vmatpush1.msra.mxu0 0.0
  %1510 = vmatprep.subr.mxu0 0.0
  %1511 = vmatpush1.msra.mxu0 0.0
  %1512 = vmatprep.subr.mxu0 0.0
  %1513 = vmatpush1.msra.mxu0 0.0
  %1514 = vmatprep.subr.mxu0 0.0
  %1515 = vmatpush1.msra.mxu0 0.0
  %1516 = vmatprep.subr.mxu0 0.0
  %1517 = vmatpush1.msra.mxu0 0.0
  %1518 = vmatprep.subr.mxu0 0.0
  %1519 = vmatpush1.msra.mxu0 0.0
  %1520 = vmatprep.subr.mxu0 0.0
  %1521 = vmatpush1.msra.mxu0 0.0
  %1522 = vmatprep.subr.mxu0 0.0
  %1523 = vmatpush1.msra.mxu0 0.0
  %1524 = vmatprep.subr.mxu0 0.0
  %1525 = vmatpush1.msra.mxu0 0.0
  %1526 = vmatprep.subr.mxu0 0.0
  %1527 = vmatpush1.msra.mxu0 0.0
  %1528 = vmatprep.subr.mxu0 0.0
  %1529 = vmatpush1.msra.mxu0 0.0
  %1530 = vmatprep.subr.mxu0 0.0
  %1531 = vmatpush1.msra.mxu0 0.0
  %1532 = vmatprep.subr.mxu0 0.0
  %1533 = vmatpush1.msra.mxu0 0.0
  %1534 = vmatprep.subr.mxu0 0.0
  %1535 = vmatpush1.msra.mxu0 0.0
  %1536 = vmatprep.subr.mxu0 0.0
  %1537 = vmatpush1.msra.mxu0 0.0
  %1538 = vmatprep.subr.mxu0 0.0
  %1539 = vmatpush1.msra.mxu0 0.0
  %1540 = vmatprep.subr.mxu0 0.0
  %1541 = vmatpush1.msra.mxu0 0.0
  %1542 = vmatprep.subr.mxu0 0.0
  %1543 = vmatpush1.msra.mxu0 0.0
  %1544 = vmatprep.subr.mxu0 0.0
  %1545 = vmatpush1.msra.mxu0 0.0
  %1546 = vmatprep.subr.mxu0 0.0
  %1547 = vmatpush1.msra.mxu0 0.0
  %1548 = vmatprep.subr.mxu0 0.0
  %1549 = vmatpush1.msra.mxu0 0.0
  %1550 = vmatprep.subr.mxu0 0.0
  %1551 = vmatpush1.msra.mxu0 0.0
  %1552 = vmatprep.subr.mxu0 0.0
  %1553 = vmatpush1.msra.mxu0 0.0
  %1554 = vmatprep.mubr.f32.mxu0 0.0
  %1555 = vmatmul.mubr.f32.gmra.mrb[0].mxu0 %v1488
  %v1556 = vpop.f32.mrb[0].mxu0
  %v1557 = vadd.f32 0.0, %v1556
  %v1558 = vpop.f32.mrb[0].mxu0
  %1559 = vdwg.mxu0
  %1560 = vmatprep.subr.mxu0 0.0
  %1561 = vmatpush1.msra.mxu0 %v33
  %1562 = vmatprep.subr.mxu0 0.0
  %1563 = vmatpush1.msra.mxu0 %v34
  %1564 = vmatprep.subr.mxu0 0.0
  %1565 = vmatpush1.msra.mxu0 %v35
  %1566 = vmatprep.subr.mxu0 0.0
  %1567 = vmatpush1.msra.mxu0 %v36
  %1568 = vmatprep.subr.mxu0 0.0
  %1569 = vmatpush1.msra.mxu0 0.0
  %1570 = vmatprep.subr.mxu0 0.0
  %1571 = vmatpush1.msra.mxu0 0.0
  %1572 = vmatprep.subr.mxu0 0.0
  %1573 = vmatpush1.msra.mxu0 0.0
  %1574 = vmatprep.subr.mxu0 0.0
  %1575 = vmatpush1.msra.mxu0 0.0
  %1576 = vmatprep.subr.mxu0 0.0
  %1577 = vmatpush1.msra.mxu0 0.0
  %1578 = vmatprep.subr.mxu0 0.0
  %1579 = vmatpush1.msra.mxu0 0.0
  %1580 = vmatprep.subr.mxu0 0.0
  %1581 = vmatpush1.msra.mxu0 0.0
  %1582 = vmatprep.subr.mxu0 0.0
  %1583 = vmatpush1.msra.mxu0 0.0
  %1584 = vmatprep.subr.mxu0 0.0
  %1585 = vmatpush1.msra.mxu0 0.0
  %1586 = vmatprep.subr.mxu0 0.0
  %1587 = vmatpush1.msra.mxu0 0.0
  %1588 = vmatprep.subr.mxu0 0.0
  %1589 = vmatpush1.msra.mxu0 0.0
  %1590 = vmatprep.subr.mxu0 0.0
  %1591 = vmatpush1.msra.mxu0 0.0
  %1592 = vmatprep.subr.mxu0 0.0
  %1593 = vmatpush1.msra.mxu0 0.0
  %1594 = vmatprep.subr.mxu0 0.0
  %1595 = vmatpush1.msra.mxu0 0.0
  %1596 = vmatprep.subr.mxu0 0.0
  %1597 = vmatpush1.msra.mxu0 0.0
  %1598 = vmatprep.subr.mxu0 0.0
  %1599 = vmatpush1.msra.mxu0 0.0
  %1600 = vmatprep.subr.mxu0 0.0
  %1601 = vmatpush1.msra.mxu0 0.0
  %1602 = vmatprep.subr.mxu0 0.0
  %1603 = vmatpush1.msra.mxu0 0.0
  %1604 = vmatprep.subr.mxu0 0.0
  %1605 = vmatpush1.msra.mxu0 0.0
  %1606 = vmatprep.subr.mxu0 0.0
  %1607 = vmatpush1.msra.mxu0 0.0
  %1608 = vmatprep.subr.mxu0 0.0
  %1609 = vmatpush1.msra.mxu0 0.0
  %1610 = vmatprep.subr.mxu0 0.0
  %1611 = vmatpush1.msra.mxu0 0.0
  %1612 = vmatprep.subr.mxu0 0.0
  %1613 = vmatpush1.msra.mxu0 0.0
  %1614 = vmatprep.subr.mxu0 0.0
  %1615 = vmatpush1.msra.mxu0 0.0
  %1616 = vmatprep.subr.mxu0 0.0
  %1617 = vmatpush1.msra.mxu0 0.0
  %1618 = vmatprep.subr.mxu0 0.0
  %1619 = vmatpush1.msra.mxu0 0.0
  %1620 = vmatprep.subr.mxu0 0.0
  %1621 = vmatpush1.msra.mxu0 0.0
  %1622 = vmatprep.subr.mxu0 0.0
  %1623 = vmatpush1.msra.mxu0 0.0
  %1624 = vmatprep.mubr.f32.mxu0 0.0
  %1625 = vmatmul.mubr.f32.gmra.mrb[0].mxu0 %v1488
  %v1626 = vpop.f32.mrb[0].mxu0
  %v1627 = vadd.f32 0.0, %v1626
  %v1628 = vpop.f32.mrb[0].mxu0
  %1629 = vdwg.mxu0
  %1630 = vmatprep.subr.mxu0 0.0
  %1631 = vmatpush1.msra.mxu0 %v37
  %1632 = vmatprep.subr.mxu0 0.0
  %1633 = vmatpush1.msra.mxu0 %v38
  %1634 = vmatprep.subr.mxu0 0.0
  %1635 = vmatpush1.msra.mxu0 %v39
  %1636 = vmatprep.subr.mxu0 0.0
  %1637 = vmatpush1.msra.mxu0 %v40
  %1638 = vmatprep.subr.mxu0 0.0
  %1639 = vmatpush1.msra.mxu0 0.0
  %1640 = vmatprep.subr.mxu0 0.0
  %1641 = vmatpush1.msra.mxu0 0.0
  %1642 = vmatprep.subr.mxu0 0.0
  %1643 = vmatpush1.msra.mxu0 0.0
  %1644 = vmatprep.subr.mxu0 0.0
  %1645 = vmatpush1.msra.mxu0 0.0
  %1646 = vmatprep.subr.mxu0 0.0
  %1647 = vmatpush1.msra.mxu0 0.0
  %1648 = vmatprep.subr.mxu0 0.0
  %1649 = vmatpush1.msra.mxu0 0.0
  %1650 = vmatprep.subr.mxu0 0.0
  %1651 = vmatpush1.msra.mxu0 0.0
  %1652 = vmatprep.subr.mxu0 0.0
  %1653 = vmatpush1.msra.mxu0 0.0
  %1654 = vmatprep.subr.mxu0 0.0
  %1655 = vmatpush1.msra.mxu0 0.0
  %1656 = vmatprep.subr.mxu0 0.0
  %1657 = vmatpush1.msra.mxu0 0.0
  %1658 = vmatprep.subr.mxu0 0.0
  %1659 = vmatpush1.msra.mxu0 0.0
  %1660 = vmatprep.subr.mxu0 0.0
  %1661 = vmatpush1.msra.mxu0 0.0
  %1662 = vmatprep.subr.mxu0 0.0
  %1663 = vmatpush1.msra.mxu0 0.0
  %1664 = vmatprep.subr.mxu0 0.0
  %1665 = vmatpush1.msra.mxu0 0.0
  %1666 = vmatprep.subr.mxu0 0.0
  %1667 = vmatpush1.msra.mxu0 0.0
  %1668 = vmatprep.subr.mxu0 0.0
  %1669 = vmatpush1.msra.mxu0 0.0
  %1670 = vmatprep.subr.mxu0 0.0
  %1671 = vmatpush1.msra.mxu0 0.0
  %1672 = vmatprep.subr.mxu0 0.0
  %1673 = vmatpush1.msra.mxu0 0.0
  %1674 = vmatprep.subr.mxu0 0.0
  %1675 = vmatpush1.msra.mxu0 0.0
  %1676 = vmatprep.subr.mxu0 0.0
  %1677 = vmatpush1.msra.mxu0 0.0
  %1678 = vmatprep.subr.mxu0 0.0
  %1679 = vmatpush1.msra.mxu0 0.0
  %1680 = vmatprep.subr.mxu0 0.0
  %1681 = vmatpush1.msra.mxu0 0.0
  %1682 = vmatprep.subr.mxu0 0.0
  %1683 = vmatpush1.msra.mxu0 0.0
  %1684 = vmatprep.subr.mxu0 0.0
  %1685 = vmatpush1.msra.mxu0 0.0
  %1686 = vmatprep.subr.mxu0 0.0
  %1687 = vmatpush1.msra.mxu0 0.0
  %1688 = vmatprep.subr.mxu0 0.0
  %1689 = vmatpush1.msra.mxu0 0.0
  %1690 = vmatprep.subr.mxu0 0.0
  %1691 = vmatpush1.msra.mxu0 0.0
  %1692 = vmatprep.subr.mxu0 0.0
  %1693 = vmatpush1.msra.mxu0 0.0
  %1694 = vmatprep.mubr.f32.mxu0 0.0
  %1695 = vmatmul.mubr.f32.gmra.mrb[0].mxu0 %v1488
  %v1696 = vpop.f32.mrb[0].mxu0
  %v1697 = vadd.f32 %v41, %v1696
  %v1698 = vpop.f32.mrb[0].mxu0
  %1699 = vdwg.mxu0
  %s1700 = scalar_lea.vmem %s0, 12
  %v1701 = vld [vmem:[%s1700] sm:$0x3]
  %v1702 = vadd.f32 %v1701, %v1557
  %v1703 = vxor.u32 %v1702, 2147483648
  %v1704 = vmul.f32 %v1703, 1.442695
  %v1705 = vpow.pop %v1704
  %v1706 = vadd.f32 %v1705, 1.0
  %v1707 = vrcp.pop %v1706
  %v1708 = vmul.f32 1.0, %v1707
  %s1709 = scalar_lea.vmem %s1, 12
  %v1710 = vld [vmem:[%s1709] sm:$0x3]
  %v1711 = vadd.f32 %v1710, %v1627
  %v1712 = vxor.u32 %v1711, 2147483648
  %v1713 = vmul.f32 %v1712, 1.442695
  %v1714 = vpow.pop %v1713
  %v1715 = vadd.f32 %v1714, 1.0
  %v1716 = vrcp.pop %v1715
  %v1717 = vmul.f32 1.0, %v1716
  %s1718 = scalar_lea.vmem %s2, 12
  %v1719 = vld [vmem:[%s1718] sm:$0x3]
  %v1720 = vmul.f32 %v1708, %v1697
  %v1721 = vadd.f32 %v1719, %v1720
  %v1722 = vtanh.pop %v1721
  %v1723 = vsub.f32 %v1484, %v1722
  %v1724 = vmul.f32 %v1717, %v1723
  %v1725 = vadd.f32 %v1722, %v1724
  %s1726 = scalar_lea.vmem %s8, 12
  %1727 = vst.msk [vmem:[%s1726] sm:$0x3] %vm280, %v1725
  %v1729 = vsel %vm43, %v1725, 0
  %1731 = vmatprep.subr.mxu0 0.0
  %1732 = vmatpush1.msra.mxu0 %v29
  %1733 = vmatprep.subr.mxu0 0.0
  %1734 = vmatpush1.msra.mxu0 %v30
  %1735 = vmatprep.subr.mxu0 0.0
  %1736 = vmatpush1.msra.mxu0 %v31
  %1737 = vmatprep.subr.mxu0 0.0
  %1738 = vmatpush1.msra.mxu0 %v32
  %1739 = vmatprep.subr.mxu0 0.0
  %1740 = vmatpush1.msra.mxu0 0.0
  %1741 = vmatprep.subr.mxu0 0.0
  %1742 = vmatpush1.msra.mxu0 0.0
  %1743 = vmatprep.subr.mxu0 0.0
  %1744 = vmatpush1.msra.mxu0 0.0
  %1745 = vmatprep.subr.mxu0 0.0
  %1746 = vmatpush1.msra.mxu0 0.0
  %1747 = vmatprep.subr.mxu0 0.0
  %1748 = vmatpush1.msra.mxu0 0.0
  %1749 = vmatprep.subr.mxu0 0.0
  %1750 = vmatpush1.msra.mxu0 0.0
  %1751 = vmatprep.subr.mxu0 0.0
  %1752 = vmatpush1.msra.mxu0 0.0
  %1753 = vmatprep.subr.mxu0 0.0
  %1754 = vmatpush1.msra.mxu0 0.0
  %1755 = vmatprep.subr.mxu0 0.0
  %1756 = vmatpush1.msra.mxu0 0.0
  %1757 = vmatprep.subr.mxu0 0.0
  %1758 = vmatpush1.msra.mxu0 0.0
  %1759 = vmatprep.subr.mxu0 0.0
  %1760 = vmatpush1.msra.mxu0 0.0
  %1761 = vmatprep.subr.mxu0 0.0
  %1762 = vmatpush1.msra.mxu0 0.0
  %1763 = vmatprep.subr.mxu0 0.0
  %1764 = vmatpush1.msra.mxu0 0.0
  %1765 = vmatprep.subr.mxu0 0.0
  %1766 = vmatpush1.msra.mxu0 0.0
  %1767 = vmatprep.subr.mxu0 0.0
  %1768 = vmatpush1.msra.mxu0 0.0
  %1769 = vmatprep.subr.mxu0 0.0
  %1770 = vmatpush1.msra.mxu0 0.0
  %1771 = vmatprep.subr.mxu0 0.0
  %1772 = vmatpush1.msra.mxu0 0.0
  %1773 = vmatprep.subr.mxu0 0.0
  %1774 = vmatpush1.msra.mxu0 0.0
  %1775 = vmatprep.subr.mxu0 0.0
  %1776 = vmatpush1.msra.mxu0 0.0
  %1777 = vmatprep.subr.mxu0 0.0
  %1778 = vmatpush1.msra.mxu0 0.0
  %1779 = vmatprep.subr.mxu0 0.0
  %1780 = vmatpush1.msra.mxu0 0.0
  %1781 = vmatprep.subr.mxu0 0.0
  %1782 = vmatpush1.msra.mxu0 0.0
  %1783 = vmatprep.subr.mxu0 0.0
  %1784 = vmatpush1.msra.mxu0 0.0
  %1785 = vmatprep.subr.mxu0 0.0
  %1786 = vmatpush1.msra.mxu0 0.0
  %1787 = vmatprep.subr.mxu0 0.0
  %1788 = vmatpush1.msra.mxu0 0.0
  %1789 = vmatprep.subr.mxu0 0.0
  %1790 = vmatpush1.msra.mxu0 0.0
  %1791 = vmatprep.subr.mxu0 0.0
  %1792 = vmatpush1.msra.mxu0 0.0
  %1793 = vmatprep.subr.mxu0 0.0
  %1794 = vmatpush1.msra.mxu0 0.0
  %1795 = vmatprep.mubr.f32.mxu0 0.0
  %1796 = vmatmul.mubr.f32.gmra.mrb[0].mxu0 %v1729
  %v1797 = vpop.f32.mrb[0].mxu0
  %v1798 = vadd.f32 0.0, %v1797
  %v1799 = vpop.f32.mrb[0].mxu0
  %1800 = vdwg.mxu0
  %1801 = vmatprep.subr.mxu0 0.0
  %1802 = vmatpush1.msra.mxu0 %v33
  %1803 = vmatprep.subr.mxu0 0.0
  %1804 = vmatpush1.msra.mxu0 %v34
  %1805 = vmatprep.subr.mxu0 0.0
  %1806 = vmatpush1.msra.mxu0 %v35
  %1807 = vmatprep.subr.mxu0 0.0
  %1808 = vmatpush1.msra.mxu0 %v36
  %1809 = vmatprep.subr.mxu0 0.0
  %1810 = vmatpush1.msra.mxu0 0.0
  %1811 = vmatprep.subr.mxu0 0.0
  %1812 = vmatpush1.msra.mxu0 0.0
  %1813 = vmatprep.subr.mxu0 0.0
  %1814 = vmatpush1.msra.mxu0 0.0
  %1815 = vmatprep.subr.mxu0 0.0
  %1816 = vmatpush1.msra.mxu0 0.0
  %1817 = vmatprep.subr.mxu0 0.0
  %1818 = vmatpush1.msra.mxu0 0.0
  %1819 = vmatprep.subr.mxu0 0.0
  %1820 = vmatpush1.msra.mxu0 0.0
  %1821 = vmatprep.subr.mxu0 0.0
  %1822 = vmatpush1.msra.mxu0 0.0
  %1823 = vmatprep.subr.mxu0 0.0
  %1824 = vmatpush1.msra.mxu0 0.0
  %1825 = vmatprep.subr.mxu0 0.0
  %1826 = vmatpush1.msra.mxu0 0.0
  %1827 = vmatprep.subr.mxu0 0.0
  %1828 = vmatpush1.msra.mxu0 0.0
  %1829 = vmatprep.subr.mxu0 0.0
  %1830 = vmatpush1.msra.mxu0 0.0
  %1831 = vmatprep.subr.mxu0 0.0
  %1832 = vmatpush1.msra.mxu0 0.0
  %1833 = vmatprep.subr.mxu0 0.0
  %1834 = vmatpush1.msra.mxu0 0.0
  %1835 = vmatprep.subr.mxu0 0.0
  %1836 = vmatpush1.msra.mxu0 0.0
  %1837 = vmatprep.subr.mxu0 0.0
  %1838 = vmatpush1.msra.mxu0 0.0
  %1839 = vmatprep.subr.mxu0 0.0
  %1840 = vmatpush1.msra.mxu0 0.0
  %1841 = vmatprep.subr.mxu0 0.0
  %1842 = vmatpush1.msra.mxu0 0.0
  %1843 = vmatprep.subr.mxu0 0.0
  %1844 = vmatpush1.msra.mxu0 0.0
  %1845 = vmatprep.subr.mxu0 0.0
  %1846 = vmatpush1.msra.mxu0 0.0
  %1847 = vmatprep.subr.mxu0 0.0
  %1848 = vmatpush1.msra.mxu0 0.0
  %1849 = vmatprep.subr.mxu0 0.0
  %1850 = vmatpush1.msra.mxu0 0.0
  %1851 = vmatprep.subr.mxu0 0.0
  %1852 = vmatpush1.msra.mxu0 0.0
  %1853 = vmatprep.subr.mxu0 0.0
  %1854 = vmatpush1.msra.mxu0 0.0
  %1855 = vmatprep.subr.mxu0 0.0
  %1856 = vmatpush1.msra.mxu0 0.0
  %1857 = vmatprep.subr.mxu0 0.0
  %1858 = vmatpush1.msra.mxu0 0.0
  %1859 = vmatprep.subr.mxu0 0.0
  %1860 = vmatpush1.msra.mxu0 0.0
  %1861 = vmatprep.subr.mxu0 0.0
  %1862 = vmatpush1.msra.mxu0 0.0
  %1863 = vmatprep.subr.mxu0 0.0
  %1864 = vmatpush1.msra.mxu0 0.0
  %1865 = vmatprep.mubr.f32.mxu0 0.0
  %1866 = vmatmul.mubr.f32.gmra.mrb[0].mxu0 %v1729
  %v1867 = vpop.f32.mrb[0].mxu0
  %v1868 = vadd.f32 0.0, %v1867
  %v1869 = vpop.f32.mrb[0].mxu0
  %1870 = vdwg.mxu0
  %1871 = vmatprep.subr.mxu0 0.0
  %1872 = vmatpush1.msra.mxu0 %v37
  %1873 = vmatprep.subr.mxu0 0.0
  %1874 = vmatpush1.msra.mxu0 %v38
  %1875 = vmatprep.subr.mxu0 0.0
  %1876 = vmatpush1.msra.mxu0 %v39
  %1877 = vmatprep.subr.mxu0 0.0
  %1878 = vmatpush1.msra.mxu0 %v40
  %1879 = vmatprep.subr.mxu0 0.0
  %1880 = vmatpush1.msra.mxu0 0.0
  %1881 = vmatprep.subr.mxu0 0.0
  %1882 = vmatpush1.msra.mxu0 0.0
  %1883 = vmatprep.subr.mxu0 0.0
  %1884 = vmatpush1.msra.mxu0 0.0
  %1885 = vmatprep.subr.mxu0 0.0
  %1886 = vmatpush1.msra.mxu0 0.0
  %1887 = vmatprep.subr.mxu0 0.0
  %1888 = vmatpush1.msra.mxu0 0.0
  %1889 = vmatprep.subr.mxu0 0.0
  %1890 = vmatpush1.msra.mxu0 0.0
  %1891 = vmatprep.subr.mxu0 0.0
  %1892 = vmatpush1.msra.mxu0 0.0
  %1893 = vmatprep.subr.mxu0 0.0
  %1894 = vmatpush1.msra.mxu0 0.0
  %1895 = vmatprep.subr.mxu0 0.0
  %1896 = vmatpush1.msra.mxu0 0.0
  %1897 = vmatprep.subr.mxu0 0.0
  %1898 = vmatpush1.msra.mxu0 0.0
  %1899 = vmatprep.subr.mxu0 0.0
  %1900 = vmatpush1.msra.mxu0 0.0
  %1901 = vmatprep.subr.mxu0 0.0
  %1902 = vmatpush1.msra.mxu0 0.0
  %1903 = vmatprep.subr.mxu0 0.0
  %1904 = vmatpush1.msra.mxu0 0.0
  %1905 = vmatprep.subr.mxu0 0.0
  %1906 = vmatpush1.msra.mxu0 0.0
  %1907 = vmatprep.subr.mxu0 0.0
  %1908 = vmatpush1.msra.mxu0 0.0
  %1909 = vmatprep.subr.mxu0 0.0
  %1910 = vmatpush1.msra.mxu0 0.0
  %1911 = vmatprep.subr.mxu0 0.0
  %1912 = vmatpush1.msra.mxu0 0.0
  %1913 = vmatprep.subr.mxu0 0.0
  %1914 = vmatpush1.msra.mxu0 0.0
  %1915 = vmatprep.subr.mxu0 0.0
  %1916 = vmatpush1.msra.mxu0 0.0
  %1917 = vmatprep.subr.mxu0 0.0
  %1918 = vmatpush1.msra.mxu0 0.0
  %1919 = vmatprep.subr.mxu0 0.0
  %1920 = vmatpush1.msra.mxu0 0.0
  %1921 = vmatprep.subr.mxu0 0.0
  %1922 = vmatpush1.msra.mxu0 0.0
  %1923 = vmatprep.subr.mxu0 0.0
  %1924 = vmatpush1.msra.mxu0 0.0
  %1925 = vmatprep.subr.mxu0 0.0
  %1926 = vmatpush1.msra.mxu0 0.0
  %1927 = vmatprep.subr.mxu0 0.0
  %1928 = vmatpush1.msra.mxu0 0.0
  %1929 = vmatprep.subr.mxu0 0.0
  %1930 = vmatpush1.msra.mxu0 0.0
  %1931 = vmatprep.subr.mxu0 0.0
  %1932 = vmatpush1.msra.mxu0 0.0
  %1933 = vmatprep.subr.mxu0 0.0
  %1934 = vmatpush1.msra.mxu0 0.0
  %1935 = vmatprep.mubr.f32.mxu0 0.0
  %1936 = vmatmul.mubr.f32.gmra.mrb[0].mxu0 %v1729
  %v1937 = vpop.f32.mrb[0].mxu0
  %v1938 = vadd.f32 %v41, %v1937
  %v1939 = vpop.f32.mrb[0].mxu0
  %1940 = vdwg.mxu0
  %s1941 = scalar_lea.vmem %s0, 14
  %v1942 = vld [vmem:[%s1941] sm:$0x3]
  %v1943 = vadd.f32 %v1942, %v1798
  %v1944 = vxor.u32 %v1943, 2147483648
  %v1945 = vmul.f32 %v1944, 1.442695
  %v1946 = vpow.pop %v1945
  %v1947 = vadd.f32 %v1946, 1.0
  %v1948 = vrcp.pop %v1947
  %v1949 = vmul.f32 1.0, %v1948
  %s1950 = scalar_lea.vmem %s1, 14
  %v1951 = vld [vmem:[%s1950] sm:$0x3]
  %v1952 = vadd.f32 %v1951, %v1868
  %v1953 = vxor.u32 %v1952, 2147483648
  %v1954 = vmul.f32 %v1953, 1.442695
  %v1955 = vpow.pop %v1954
  %v1956 = vadd.f32 %v1955, 1.0
  %v1957 = vrcp.pop %v1956
  %v1958 = vmul.f32 1.0, %v1957
  %s1959 = scalar_lea.vmem %s2, 14
  %v1960 = vld [vmem:[%s1959] sm:$0x3]
  %v1961 = vmul.f32 %v1949, %v1938
  %v1962 = vadd.f32 %v1960, %v1961
  %v1963 = vtanh.pop %v1962
  %v1964 = vsub.f32 %v1725, %v1963
  %v1965 = vmul.f32 %v1958, %v1964
  %v1966 = vadd.f32 %v1963, %v1965
  %s1967 = scalar_lea.vmem %s8, 14
  %1968 = vst.msk [vmem:[%s1967] sm:$0x3] %vm280, %v1966
  // Predicated region
  $region34: #{rnn_forward.1} parent=0 // pred_check
    _
  $region35: #{rnn_forward.1} parent=0 // pred_check_branch
    %1970 = sbr.rel (0) target = $region37
  $region36: #{rnn_forward.1} parent=0 // pred_region
    _
  $region37: #{rnn_forward.1} parent=0 // pred_fallthru
    _
  // Predicated region
  $region38: #{rnn_forward.1} parent=0 // pred_check
    _
  $region39: #{rnn_forward.1} parent=0 // pred_check_branch
    %1972 = sbr.rel (0) target = $region41
  $region40: #{rnn_forward.1} parent=0 // pred_region
    _
  $region41: #{rnn_forward.1} parent=0 // pred_fallthru
    _

</llo_original>
